<compile_context>
chip_gen: v7x
topology: tpu7x:2x2x1
jax: 0.10.0
libtpu: 0.0.40
codegen_flags: <defaults>
</compile_context>

<pallas_src>
import numpy as np

import jax
import jax.numpy as jnp
from jax import lax
from jax.experimental import pallas as pl
from jax.experimental.pallas import tpu as pltpu


# ----------------------------------------------------------------------------
# Tile / chunk selection.
# Tiles hold an integer number of (H, W) planes inside ONE batch element, are
# lane-aligned (multiple of 128) or the full per-batch slab, and we prefer >=4
# total grid steps (v7x: 2 TCs share the parallel axes), then >=2, then the
# largest tile in budget (v5e/v6e single-TC: don't force splits).
# ----------------------------------------------------------------------------
def _pick_tile_lanes(B, D, HW, max_lanes=2048):
    dhw = D * HW
    cands = []
    for tbd in range(1, D + 1):
        if D % tbd:
            continue
        tn = tbd * HW
        if tn % 128 == 0 or tn == dhw:
            cands.append(tn)
    # TODO(synk): for HW that is not 128-friendly the only legal tile can be the
    # full per-batch slab; padding W up to a lane-friendly width would keep
    # multi-step grids there as well.
    steps = lambda tn: B * (dhw // tn)
    for min_steps in (4, 2):
        pref = [t for t in cands if t <= max_lanes and steps(t) >= min_steps]
        if pref:
            return max(pref)
    fit = [t for t in cands if t <= max_lanes]
    return max(fit) if fit else min(cands)


def _pick_chunk_lanes(tn):
    """Largest 128-multiple <= 512 dividing tn (keeps intermediates in vregs)."""
    for c in (512, 384, 256, 128):
        if tn % c == 0:
            return c
    return tn


# ----------------------------------------------------------------------------
# Fused kernel: channel-sum gradients + dxx/dxy broadcast + conv1..conv4 (+ReLU).
# ----------------------------------------------------------------------------
def _make_fused_kernel(W, chunk):
    def kernel(x_ref, mhp_ref, mhm_ref, mwp_ref, mwm_ref,
               w1x_ref, w1gh_ref, w1gw_ref, b1_ref,
               w2_ref, b2_ref, w3_ref, b3_ref, w4_ref, b4_ref,
               out_ref, dxx_ref, dxy_ref):
        x = x_ref[...]                                  # (C, TN) f32
        tn = x.shape[1]
        s = jnp.sum(x, axis=0, keepdims=True)           # (1, TN) channel sum

        # Central differences via XLU lane rotations.  Precomputed interior masks
        # (with 0.5 folded in) zero exactly the wrap-around / plane-crossing lanes
        # (== the conv's zero padding), so no in-kernel iota/div/mod is needed.
        s_hp = pltpu.roll(s, (tn - W) % tn, axis=1)     # S[n + W]
        s_hm = pltpu.roll(s, W % tn, axis=1)            # S[n - W]
        s_wp = pltpu.roll(s, (tn - 1) % tn, axis=1)     # S[n + 1]
        s_wm = pltpu.roll(s, 1 % tn, axis=1)            # S[n - 1]
        gh = mhp_ref[...] * s_hp - mhm_ref[...] * s_hm
        gw = mwp_ref[...] * s_wp - mwm_ref[...] * s_wm

        # dxx / dxy are identical across their df channels: emit the broadcast
        # directly from the kernel (lane-dense stores), no wrapper broadcast pass.
        dxx_ref[...] = jnp.broadcast_to(gh, dxx_ref.shape)
        dxy_ref[...] = jnp.broadcast_to(gw, dxy_ref.shape)

        def compute_chunk(c0, ch):
            xc = x_ref[:, pl.ds(c0, ch)]                         # (C, ch)
            ghc = dxx_ref[pl.ds(0, 1), pl.ds(c0, ch)]            # (1, ch)
            gwc = dxy_ref[pl.ds(0, 1), pl.ds(c0, ch)]            # (1, ch)
            # conv1 + ReLU; broadcast-gradient channels folded in as rank-1 terms.
            h1 = jnp.dot(w1x_ref[...], xc, preferred_element_type=jnp.float32)
            h1 = jnp.maximum(
                h1 + w1gh_ref[...] * ghc + w1gw_ref[...] * gwc + b1_ref[...], 0.0)
            # conv2 / conv3 + ReLU: lane-dense (Cout, ch) MXU matmuls.
            h2 = jnp.maximum(
                jnp.dot(w2_ref[...], h1, preferred_element_type=jnp.float32)
                + b2_ref[...], 0.0)
            h3 = jnp.maximum(
                jnp.dot(w3_ref[...], h2, preferred_element_type=jnp.float32)
                + b3_ref[...], 0.0)
            # conv4 (Cout == 1): VPU multiply + cross-sublane reduce.
            h4 = jnp.sum(w4_ref[...] * h3, axis=0, keepdims=True) + b4_ref[...]
            out_ref[:, pl.ds(c0, ch)] = jnp.maximum(h4, 0.0)

        n_chunks = tn // chunk
        if n_chunks <= 1:
            compute_chunk(0, tn)
        else:
            # Chunked so h1/h2/h3 for one chunk fit in the vreg file (no VMEM spill).
            def body(ci, carry):
                compute_chunk(pl.multiple_of(ci * chunk, 128), chunk)
                return carry
            lax.fori_loop(0, n_chunks, body, 0, unroll=True)

    return kernel


# ----------------------------------------------------------------------------
# Onion rings: padding=1 on kernel-size-1 convs makes the 4 outermost shells of
# the output pure functions of the weights.  Attach them with one zero-pad of the
# data core + one ring-select pass (instead of 4 sequential lax.pad passes).
# ----------------------------------------------------------------------------
def _attach_onion_rings(core, ring_vals):
    B, _, D, H, W = core.shape
    Dp, Hp, Wp = D + 8, H + 8, W + 8

    def border_dist(L):
        i = jnp.arange(L)
        return jnp.minimum(i, (L - 1) - i)

    r = jnp.minimum(jnp.minimum(border_dist(Dp)[:, None, None],
                                border_dist(Hp)[None, :, None]),
                    border_dist(Wp)[None, None, :])              # (Dp, Hp, Wp)
    shell = jnp.where(r == 0, ring_vals[0],
            jnp.where(r == 1, ring_vals[1],
            jnp.where(r == 2, ring_vals[2], ring_vals[3]))).astype(core.dtype)
    padded = jnp.pad(core, ((0, 0), (0, 0), (4, 4), (4, 4), (4, 4)))
    return jnp.where((r >= 4)[None, None], padded, shell[None, None])


# ----------------------------------------------------------------------------
# Forward pass.
# ----------------------------------------------------------------------------
def _ham_part_forward_impl(params, x):
    B, C, D, H, W = x.shape            # C == df
    HW, DHW = H * W, D * H * W

    w1, b1 = params["conv1"]
    w2, b2 = params["conv2"]
    w3, b3 = params["conv3"]
    w4, b4 = params["conv4"]
    C1, C2, C3 = w1.shape[0], w2.shape[0], w3.shape[0]

    # Batch-local channel-leading layout: pure reshape, no transpose/HBM pass.
    x_bcn = x.reshape(B, C, DHW)

    # conv1 split: x columns + channel-summed gradient columns (rank-1 folding).
    w1x = w1[:, :C]
    w1gh = jnp.sum(w1[:, C:2 * C], axis=1, keepdims=True)
    w1gw = jnp.sum(w1[:, 2 * C:], axis=1, keepdims=True)

    tn = _pick_tile_lanes(B, D, HW)
    chunk = _pick_chunk_lanes(tn)
    grid = (B, DHW // tn)

    # Precomputed interior masks (0.5 folded in).  Tiles hold whole (H, W) planes,
    # so one (1, tn) pattern serves every grid step via a constant-index BlockSpec.
    lane = np.arange(tn)
    h_i = (lane % HW) // W
    w_i = lane % W
    mk = lambda m: jnp.asarray(np.where(m, 0.5, 0.0)[None, :], dtype=x.dtype)
    mhp, mhm = mk(h_i < H - 1), mk(h_i > 0)
    mwp, mwm = mk(w_i < W - 1), mk(w_i > 0)

    def const2d(shape):
        return pl.BlockSpec(shape, lambda b, s: (0, 0))

    core, dxx, dxy = pl.pallas_call(
        _make_fused_kernel(W, chunk),
        out_shape=(jax.ShapeDtypeStruct((B, 1, DHW), x.dtype),
                   jax.ShapeDtypeStruct((B, C, DHW), x.dtype),
                   jax.ShapeDtypeStruct((B, C, DHW), x.dtype)),
        grid_spec=pltpu.PrefetchScalarGridSpec(
            num_scalar_prefetch=0,
            grid=grid,
            in_specs=[
                pl.BlockSpec((None, C, tn), lambda b, s: (b, 0, s)),   # x tile
                const2d((1, tn)), const2d((1, tn)),                    # h-masks
                const2d((1, tn)), const2d((1, tn)),                    # w-masks
                const2d((C1, C)), const2d((C1, 1)), const2d((C1, 1)), const2d((C1, 1)),
                const2d((C2, C1)), const2d((C2, 1)),
                const2d((C3, C2)), const2d((C3, 1)),
                const2d((C3, 1)), const2d((1, 1)),
            ],
            out_specs=[
                pl.BlockSpec((None, 1, tn), lambda b, s: (b, 0, s)),   # conv4 core
                pl.BlockSpec((None, C, tn), lambda b, s: (b, 0, s)),   # dxx
                pl.BlockSpec((None, C, tn), lambda b, s: (b, 0, s)),   # dxy
            ],
        ),
        compiler_params=pltpu.CompilerParams(
            dimension_semantics=("parallel", "parallel")),
    )(x_bcn, mhp, mhm, mwp, mwm,
      w1x, w1gh, w1gw, b1[:, None],
      w2, b2[:, None], w3, b3[:, None], w4.T, b4.reshape(1, 1))

    # Free reshapes (kernel already wrote batch-local, lane-dense blocks).
    core = core.reshape(B, 1, D, H, W)
    dxx = dxx.reshape(B, C, D, H, W)
    dxy = dxy.reshape(B, C, D, H, W)

    # Ring constants (exact f32), then single pad + ring-select.
    relu = lambda v: jnp.maximum(v, 0.0)
    dotv = lambda w, v: jnp.sum(w * v[None, :], axis=1)
    u1 = relu(b1)
    u2_0, u2_1 = relu(b2), relu(dotv(w2, u1) + b2)
    u3_0, u3_1, u3_2 = (relu(b3),
                        relu(dotv(w3, u2_0) + b3),
                        relu(dotv(w3, u2_1) + b3))
    ring_vals = (relu(b4)[0],
                 relu(dotv(w4, u3_0) + b4)[0],
                 relu(dotv(w4, u3_1) + b4)[0],
                 relu(dotv(w4, u3_2) + b4)[0])
    out = _attach_onion_rings(core, ring_vals)
    return out, x, dxx, dxy


ham_part_forward = jax.jit(_ham_part_forward_impl)


# ----------------------------------------------------------------------------
# Parameter init (deterministic, mimics PyTorch Conv3d default uniform init).
# Dropout3d layers of the PyTorch module are never used in forward().
# ----------------------------------------------------------------------------
def init_ham_part_params(key, df):
    def init_conv(k, cin, cout):
        k1, k2 = jax.random.split(k)
        bound = 1.0 / (cin ** 0.5)
        w = jax.random.uniform(k1, (cout, cin), jnp.float32, -bound, bound)
        b = jax.random.uniform(k2, (cout,), jnp.float32, -bound, bound)
        return w, b

    k1, k2, k3, k4 = jax.random.split(key, 4)
    return {
        "conv1": init_conv(k1, df * 3, df * 6),
        "conv2": init_conv(k2, df * 6, df * 6),
        "conv3": init_conv(k3, df * 6, df * 3),
        "conv4": init_conv(k4, df * 3, 1),
    }


# ----------------------------------------------------------------------------
# Pure-JAX reference (no Pallas) for verification.
# ----------------------------------------------------------------------------
def ham_part_reference(params, x):
    s = jnp.sum(x, axis=1, keepdims=True)
    sh = jnp.pad(s, ((0, 0), (0, 0), (0, 0), (1, 1), (0, 0)))
    sw = jnp.pad(s, ((0, 0), (0, 0), (0, 0), (0, 0), (1, 1)))
    dxx = jnp.broadcast_to(0.5 * (sh[:, :, :, 2:, :] - sh[:, :, :, :-2, :]), x.shape)
    dxy = jnp.broadcast_to(0.5 * (sw[:, :, :, :, 2:] - sw[:, :, :, :, :-2]), x.shape)
    h = jnp.concatenate([x, dxx, dxy], axis=1)
    for name in ("conv1", "conv2", "conv3", "conv4"):
        w, b = params[name]
        hp = jnp.pad(h, ((0, 0), (0, 0), (1, 1), (1, 1), (1, 1)))
        h = jnp.einsum("bcdhw,oc->bodhw", hp, w,
                       precision=jax.lax.Precision.HIGHEST)
        h = jnp.maximum(h + b[None, :, None, None, None], 0.0)
    return h, x, dxx, dxy


if __name__ == "__main__":
    def run_case(key, B, df, D, H, W):
        kx, kp = jax.random.split(key)
        x = jax.random.normal(kx, (B, df, D, H, W), dtype=jnp.float32)
        params = init_ham_part_params(kp, df)

        out, x_out, dxx, dxy = ham_part_forward(params, x)
        jax.block_until_ready(out)

        ref_out, _, ref_dxx, ref_dxy = ham_part_reference(params, x)
        assert out.shape == (B, 1, D + 8, H + 8, W + 8), out.shape
        assert dxx.shape == x.shape and dxy.shape == x.shape
        assert jnp.allclose(dxx, ref_dxx, atol=1e-5, rtol=1e-5)
        assert jnp.allclose(dxy, ref_dxy, atol=1e-5, rtol=1e-5)
        assert jnp.allclose(out, ref_out, atol=2e-3, rtol=2e-3)

    key = jax.random.PRNGKey(0)
    k1, k2 = jax.random.split(key)
    run_case(k1, B=2, df=4, D=4, H=8, W=8)      # tn=128, single-chunk path
    run_case(k2, B=1, df=4, D=4, H=32, W=32)    # tn=1024, 2 x 512-lane chunks

    print("KERNEL_OK")
</pallas_src>

<mosaic_0001>
module attributes {stable_mosaic.version = 11 : i64} {
  func.func @kernel(%arg0: i32, %arg1: i32, %arg2: memref<1x4x128xf32, #tpu.memory_space<vmem>>, %arg3: memref<1x128xf32, #tpu.memory_space<vmem>>, %arg4: memref<1x128xf32, #tpu.memory_space<vmem>>, %arg5: memref<1x128xf32, #tpu.memory_space<vmem>>, %arg6: memref<1x128xf32, #tpu.memory_space<vmem>>, %arg7: memref<24x4xf32, #tpu.memory_space<vmem>>, %arg8: memref<24x1xf32, #tpu.memory_space<vmem>>, %arg9: memref<24x1xf32, #tpu.memory_space<vmem>>, %arg10: memref<24x1xf32, #tpu.memory_space<vmem>>, %arg11: memref<24x24xf32, #tpu.memory_space<vmem>>, %arg12: memref<24x1xf32, #tpu.memory_space<vmem>>, %arg13: memref<12x24xf32, #tpu.memory_space<vmem>>, %arg14: memref<12x1xf32, #tpu.memory_space<vmem>>, %arg15: memref<12x1xf32, #tpu.memory_space<vmem>>, %arg16: memref<1x1xf32, #tpu.memory_space<vmem>>, %arg17: memref<1x1x128xf32, #tpu.memory_space<vmem>>, %arg18: memref<1x4x128xf32, #tpu.memory_space<vmem>>, %arg19: memref<1x4x128xf32, #tpu.memory_space<vmem>>) attributes {dimension_semantics = [#tpu.dimension_semantics<parallel>, #tpu.dimension_semantics<parallel>], iteration_bounds = array<i64: 2, 2>, scalar_prefetch = 0 : i64, scratch_operands = 0 : i64, tpu.core_type = #tpu.core_type<tc>, window_params = [{transform_indices = @transform_0, window_bounds = array<i64: 1, 4, 128>}, {pipeline_mode = #tpu.pipeline_mode<synchronous>, transform_indices = @transform_1, window_bounds = array<i64: 1, 128>}, {pipeline_mode = #tpu.pipeline_mode<synchronous>, transform_indices = @transform_2, window_bounds = array<i64: 1, 128>}, {pipeline_mode = #tpu.pipeline_mode<synchronous>, transform_indices = @transform_3, window_bounds = array<i64: 1, 128>}, {pipeline_mode = #tpu.pipeline_mode<synchronous>, transform_indices = @transform_4, window_bounds = array<i64: 1, 128>}, {pipeline_mode = #tpu.pipeline_mode<synchronous>, transform_indices = @transform_5, window_bounds = array<i64: 24, 4>}, {pipeline_mode = #tpu.pipeline_mode<synchronous>, transform_indices = @transform_6, window_bounds = array<i64: 24, 1>}, {pipeline_mode = #tpu.pipeline_mode<synchronous>, transform_indices = @transform_7, window_bounds = array<i64: 24, 1>}, {pipeline_mode = #tpu.pipeline_mode<synchronous>, transform_indices = @transform_8, window_bounds = array<i64: 24, 1>}, {pipeline_mode = #tpu.pipeline_mode<synchronous>, transform_indices = @transform_9, window_bounds = array<i64: 24, 24>}, {pipeline_mode = #tpu.pipeline_mode<synchronous>, transform_indices = @transform_10, window_bounds = array<i64: 24, 1>}, {pipeline_mode = #tpu.pipeline_mode<synchronous>, transform_indices = @transform_11, window_bounds = array<i64: 12, 24>}, {pipeline_mode = #tpu.pipeline_mode<synchronous>, transform_indices = @transform_12, window_bounds = array<i64: 12, 1>}, {pipeline_mode = #tpu.pipeline_mode<synchronous>, transform_indices = @transform_13, window_bounds = array<i64: 12, 1>}, {pipeline_mode = #tpu.pipeline_mode<synchronous>, transform_indices = @transform_14, window_bounds = array<i64: 1, 1>}, {transform_indices = @transform_15, window_bounds = array<i64: 1, 1, 128>}, {transform_indices = @transform_16, window_bounds = array<i64: 1, 4, 128>}, {transform_indices = @transform_17, window_bounds = array<i64: 1, 4, 128>}]} {
    %c0 = arith.constant 0 : index
    %c0_0 = arith.constant 0 : index
    %c0_1 = arith.constant 0 : index
    %0 = vector.load %arg2[%c0, %c0_0, %c0_1] : memref<1x4x128xf32, #tpu.memory_space<vmem>>, vector<1x4x128xf32>
    %1 = vector.shape_cast %0 : vector<1x4x128xf32> to vector<4x128xf32>
    %cst = arith.constant dense<0.000000e+00> : vector<128xf32>
    %2 = vector.multi_reduction <add>, %1, %cst [0] : vector<4x128xf32> to vector<128xf32>
    %3 = vector.shape_cast %2 : vector<128xf32> to vector<1x128xf32>
    %c120_i32 = arith.constant 120 : i32
    %4 = tpu.dynamic_rotate %3 by %c120_i32 dim 1 : vector<1x128xf32>, i32 -> vector<1x128xf32>
    %c8_i32 = arith.constant 8 : i32
    %5 = tpu.dynamic_rotate %3 by %c8_i32 dim 1 : vector<1x128xf32>, i32 -> vector<1x128xf32>
    %c127_i32 = arith.constant 127 : i32
    %6 = tpu.dynamic_rotate %3 by %c127_i32 dim 1 : vector<1x128xf32>, i32 -> vector<1x128xf32>
    %c1_i32 = arith.constant 1 : i32
    %7 = tpu.dynamic_rotate %3 by %c1_i32 dim 1 : vector<1x128xf32>, i32 -> vector<1x128xf32>
    %c0_2 = arith.constant 0 : index
    %c0_3 = arith.constant 0 : index
    %8 = vector.load %arg3[%c0_2, %c0_3] : memref<1x128xf32, #tpu.memory_space<vmem>>, vector<1x128xf32>
    %9 = arith.mulf %8, %4 : vector<1x128xf32>
    %c0_4 = arith.constant 0 : index
    %c0_5 = arith.constant 0 : index
    %10 = vector.load %arg4[%c0_4, %c0_5] : memref<1x128xf32, #tpu.memory_space<vmem>>, vector<1x128xf32>
    %11 = arith.mulf %10, %5 : vector<1x128xf32>
    %12 = arith.subf %9, %11 : vector<1x128xf32>
    %c0_6 = arith.constant 0 : index
    %c0_7 = arith.constant 0 : index
    %13 = vector.load %arg5[%c0_6, %c0_7] : memref<1x128xf32, #tpu.memory_space<vmem>>, vector<1x128xf32>
    %14 = arith.mulf %13, %6 : vector<1x128xf32>
    %c0_8 = arith.constant 0 : index
    %c0_9 = arith.constant 0 : index
    %15 = vector.load %arg6[%c0_8, %c0_9] : memref<1x128xf32, #tpu.memory_space<vmem>>, vector<1x128xf32>
    %16 = arith.mulf %15, %7 : vector<1x128xf32>
    %17 = arith.subf %14, %16 : vector<1x128xf32>
    %18 = vector.shape_cast %12 : vector<1x128xf32> to vector<1x128xf32>
    %19 = vector.broadcast %18 : vector<1x128xf32> to vector<4x128xf32>
    %c0_10 = arith.constant 0 : index
    %c0_11 = arith.constant 0 : index
    %c0_12 = arith.constant 0 : index
    %20 = vector.load %arg18[%c0_10, %c0_11, %c0_12] : memref<1x4x128xf32, #tpu.memory_space<vmem>>, vector<1x4x128xf32>
    %21 = vector.shape_cast %20 : vector<1x4x128xf32> to vector<4x128xf32>
    %22 = vector.shape_cast %19 : vector<4x128xf32> to vector<1x4x128xf32>
    tpu.vector_store %arg18[%c0_10, %c0_11, %c0_12], %22 {strides = array<i32>} : memref<1x4x128xf32, #tpu.memory_space<vmem>>, vector<1x4x128xf32>,
    %23 = vector.shape_cast %17 : vector<1x128xf32> to vector<1x128xf32>
    %24 = vector.broadcast %23 : vector<1x128xf32> to vector<4x128xf32>
    %c0_13 = arith.constant 0 : index
    %c0_14 = arith.constant 0 : index
    %c0_15 = arith.constant 0 : index
    %25 = vector.load %arg19[%c0_13, %c0_14, %c0_15] : memref<1x4x128xf32, #tpu.memory_space<vmem>>, vector<1x4x128xf32>
    %26 = vector.shape_cast %25 : vector<1x4x128xf32> to vector<4x128xf32>
    %27 = vector.shape_cast %24 : vector<4x128xf32> to vector<1x4x128xf32>
    tpu.vector_store %arg19[%c0_13, %c0_14, %c0_15], %27 {strides = array<i32>} : memref<1x4x128xf32, #tpu.memory_space<vmem>>, vector<1x4x128xf32>,
    %c0_16 = arith.constant 0 : index
    %c0_17 = arith.constant 0 : index
    %c0_18 = arith.constant 0 : index
    %28 = vector.load %arg2[%c0_16, %c0_17, %c0_18] : memref<1x4x128xf32, #tpu.memory_space<vmem>>, vector<1x4x128xf32>
    %29 = vector.shape_cast %28 : vector<1x4x128xf32> to vector<4x128xf32>
    %c0_19 = arith.constant 0 : index
    %c0_20 = arith.constant 0 : index
    %c0_21 = arith.constant 0 : index
    %30 = vector.load %arg18[%c0_19, %c0_20, %c0_21] : memref<1x4x128xf32, #tpu.memory_space<vmem>>, vector<1x1x128xf32>
    %31 = vector.shape_cast %30 : vector<1x1x128xf32> to vector<1x128xf32>
    %c0_22 = arith.constant 0 : index
    %c0_23 = arith.constant 0 : index
    %c0_24 = arith.constant 0 : index
    %32 = vector.load %arg19[%c0_22, %c0_23, %c0_24] : memref<1x4x128xf32, #tpu.memory_space<vmem>>, vector<1x1x128xf32>
    %33 = vector.shape_cast %32 : vector<1x1x128xf32> to vector<1x128xf32>
    %c0_25 = arith.constant 0 : index
    %c0_26 = arith.constant 0 : index
    %34 = vector.load %arg7[%c0_25, %c0_26] : memref<24x4xf32, #tpu.memory_space<vmem>>, vector<24x4xf32>
    %cst_27 = arith.constant dense<0.000000e+00> : vector<24x128xf32>
    %35 = tpu.matmul %34, %29, %cst_27 {dimension_numbers = #tpu.dot_dimension_numbers<[1], [0], [0], [1], [0, 0, 1, 1], [], []>} : vector<24x4xf32>, vector<4x128xf32>, vector<24x128xf32> -> vector<24x128xf32>
    %c0_28 = arith.constant 0 : index
    %c0_29 = arith.constant 0 : index
    %36 = vector.load %arg8[%c0_28, %c0_29] : memref<24x1xf32, #tpu.memory_space<vmem>>, vector<24x1xf32>
    %37 = vector.broadcast %36 : vector<24x1xf32> to vector<24x128xf32>
    %38 = vector.broadcast %31 : vector<1x128xf32> to vector<24x128xf32>
    %39 = arith.mulf %37, %38 : vector<24x128xf32>
    %40 = arith.addf %35, %39 : vector<24x128xf32>
    %c0_30 = arith.constant 0 : index
    %c0_31 = arith.constant 0 : index
    %41 = vector.load %arg9[%c0_30, %c0_31] : memref<24x1xf32, #tpu.memory_space<vmem>>, vector<24x1xf32>
    %42 = vector.broadcast %41 : vector<24x1xf32> to vector<24x128xf32>
    %43 = vector.broadcast %33 : vector<1x128xf32> to vector<24x128xf32>
    %44 = arith.mulf %42, %43 : vector<24x128xf32>
    %45 = arith.addf %40, %44 : vector<24x128xf32>
    %c0_32 = arith.constant 0 : index
    %c0_33 = arith.constant 0 : index
    %46 = vector.load %arg10[%c0_32, %c0_33] : memref<24x1xf32, #tpu.memory_space<vmem>>, vector<24x1xf32>
    %47 = vector.broadcast %46 : vector<24x1xf32> to vector<24x128xf32>
    %48 = arith.addf %45, %47 : vector<24x128xf32>
    %cst_34 = arith.constant 0.000000e+00 : f32
    %49 = vector.broadcast %cst_34 : f32 to vector<24x128xf32>
    %50 = arith.maximumf %48, %49 : vector<24x128xf32>
    %c0_35 = arith.constant 0 : index
    %c0_36 = arith.constant 0 : index
    %51 = vector.load %arg11[%c0_35, %c0_36] : memref<24x24xf32, #tpu.memory_space<vmem>>, vector<24x24xf32>
    %cst_37 = arith.constant dense<0.000000e+00> : vector<24x128xf32>
    %52 = tpu.matmul %51, %50, %cst_37 {dimension_numbers = #tpu.dot_dimension_numbers<[1], [0], [0], [1], [0, 0, 1, 1], [], []>} : vector<24x24xf32>, vector<24x128xf32>, vector<24x128xf32> -> vector<24x128xf32>
    %c0_38 = arith.constant 0 : index
    %c0_39 = arith.constant 0 : index
    %53 = vector.load %arg12[%c0_38, %c0_39] : memref<24x1xf32, #tpu.memory_space<vmem>>, vector<24x1xf32>
    %54 = vector.broadcast %53 : vector<24x1xf32> to vector<24x128xf32>
    %55 = arith.addf %52, %54 : vector<24x128xf32>
    %cst_40 = arith.constant 0.000000e+00 : f32
    %56 = vector.broadcast %cst_40 : f32 to vector<24x128xf32>
    %57 = arith.maximumf %55, %56 : vector<24x128xf32>
    %c0_41 = arith.constant 0 : index
    %c0_42 = arith.constant 0 : index
    %58 = vector.load %arg13[%c0_41, %c0_42] : memref<12x24xf32, #tpu.memory_space<vmem>>, vector<12x24xf32>
    %cst_43 = arith.constant dense<0.000000e+00> : vector<12x128xf32>
    %59 = tpu.matmul %58, %57, %cst_43 {dimension_numbers = #tpu.dot_dimension_numbers<[1], [0], [0], [1], [0, 0, 1, 1], [], []>} : vector<12x24xf32>, vector<24x128xf32>, vector<12x128xf32> -> vector<12x128xf32>
    %c0_44 = arith.constant 0 : index
    %c0_45 = arith.constant 0 : index
    %60 = vector.load %arg14[%c0_44, %c0_45] : memref<12x1xf32, #tpu.memory_space<vmem>>, vector<12x1xf32>
    %61 = vector.broadcast %60 : vector<12x1xf32> to vector<12x128xf32>
    %62 = arith.addf %59, %61 : vector<12x128xf32>
    %cst_46 = arith.constant 0.000000e+00 : f32
    %63 = vector.broadcast %cst_46 : f32 to vector<12x128xf32>
    %64 = arith.maximumf %62, %63 : vector<12x128xf32>
    %c0_47 = arith.constant 0 : index
    %c0_48 = arith.constant 0 : index
    %65 = vector.load %arg15[%c0_47, %c0_48] : memref<12x1xf32, #tpu.memory_space<vmem>>, vector<12x1xf32>
    %66 = vector.broadcast %65 : vector<12x1xf32> to vector<12x128xf32>
    %67 = arith.mulf %66, %64 : vector<12x128xf32>
    %cst_49 = arith.constant dense<0.000000e+00> : vector<128xf32>
    %68 = vector.multi_reduction <add>, %67, %cst_49 [0] : vector<12x128xf32> to vector<128xf32>
    %69 = vector.shape_cast %68 : vector<128xf32> to vector<1x128xf32>
    %c0_50 = arith.constant 0 : index
    %c0_51 = arith.constant 0 : index
    %70 = vector.load %arg16[%c0_50, %c0_51] : memref<1x1xf32, #tpu.memory_space<vmem>>, vector<1x1xf32>
    %71 = vector.broadcast %70 : vector<1x1xf32> to vector<1x128xf32>
    %72 = arith.addf %69, %71 : vector<1x128xf32>
    %cst_52 = arith.constant 0.000000e+00 : f32
    %73 = vector.broadcast %cst_52 : f32 to vector<1x128xf32>
    %74 = arith.maximumf %72, %73 : vector<1x128xf32>
    %c0_53 = arith.constant 0 : index
    %c0_54 = arith.constant 0 : index
    %c0_55 = arith.constant 0 : index
    %75 = vector.load %arg17[%c0_53, %c0_54, %c0_55] : memref<1x1x128xf32, #tpu.memory_space<vmem>>, vector<1x1x128xf32>
    %76 = vector.shape_cast %75 : vector<1x1x128xf32> to vector<1x128xf32>
    %77 = vector.shape_cast %74 : vector<1x128xf32> to vector<1x1x128xf32>
    tpu.vector_store %arg17[%c0_53, %c0_54, %c0_55], %77 {strides = array<i32>} : memref<1x1x128xf32, #tpu.memory_space<vmem>>, vector<1x1x128xf32>,
    return
  }
  func.func @transform_0(%arg0: i32, %arg1: i32) -> (i32, i32, i32) {
    %c0_i32 = arith.constant 0 : i32
    %c0_i32_0 = arith.constant 0 : i32
    return %arg0, %c0_i32, %arg1 : i32, i32, i32
  }
  func.func @transform_1(%arg0: i32, %arg1: i32) -> (i32, i32) {
    %c0_i32 = arith.constant 0 : i32
    %c0_i32_0 = arith.constant 0 : i32
    %c0_i32_1 = arith.constant 0 : i32
    return %c0_i32, %c0_i32_0 : i32, i32
  }
  func.func @transform_2(%arg0: i32, %arg1: i32) -> (i32, i32) {
    %c0_i32 = arith.constant 0 : i32
    %c0_i32_0 = arith.constant 0 : i32
    %c0_i32_1 = arith.constant 0 : i32
    return %c0_i32, %c0_i32_0 : i32, i32
  }
  func.func @transform_3(%arg0: i32, %arg1: i32) -> (i32, i32) {
    %c0_i32 = arith.constant 0 : i32
    %c0_i32_0 = arith.constant 0 : i32
    %c0_i32_1 = arith.constant 0 : i32
    return %c0_i32, %c0_i32_0 : i32, i32
  }
  func.func @transform_4(%arg0: i32, %arg1: i32) -> (i32, i32) {
    %c0_i32 = arith.constant 0 : i32
    %c0_i32_0 = arith.constant 0 : i32
    %c0_i32_1 = arith.constant 0 : i32
    return %c0_i32, %c0_i32_0 : i32, i32
  }
  func.func @transform_5(%arg0: i32, %arg1: i32) -> (i32, i32) {
    %c0_i32 = arith.constant 0 : i32
    %c0_i32_0 = arith.constant 0 : i32
    %c0_i32_1 = arith.constant 0 : i32
    return %c0_i32, %c0_i32_0 : i32, i32
  }
  func.func @transform_6(%arg0: i32, %arg1: i32) -> (i32, i32) {
    %c0_i32 = arith.constant 0 : i32
    %c0_i32_0 = arith.constant 0 : i32
    %c0_i32_1 = arith.constant 0 : i32
    return %c0_i32, %c0_i32_0 : i32, i32
  }
  func.func @transform_7(%arg0: i32, %arg1: i32) -> (i32, i32) {
    %c0_i32 = arith.constant 0 : i32
    %c0_i32_0 = arith.constant 0 : i32
    %c0_i32_1 = arith.constant 0 : i32
    return %c0_i32, %c0_i32_0 : i32, i32
  }
  func.func @transform_8(%arg0: i32, %arg1: i32) -> (i32, i32) {
    %c0_i32 = arith.constant 0 : i32
    %c0_i32_0 = arith.constant 0 : i32
    %c0_i32_1 = arith.constant 0 : i32
    return %c0_i32, %c0_i32_0 : i32, i32
  }
  func.func @transform_9(%arg0: i32, %arg1: i32) -> (i32, i32) {
    %c0_i32 = arith.constant 0 : i32
    %c0_i32_0 = arith.constant 0 : i32
    %c0_i32_1 = arith.constant 0 : i32
    return %c0_i32, %c0_i32_0 : i32, i32
  }
  func.func @transform_10(%arg0: i32, %arg1: i32) -> (i32, i32) {
    %c0_i32 = arith.constant 0 : i32
    %c0_i32_0 = arith.constant 0 : i32
    %c0_i32_1 = arith.constant 0 : i32
    return %c0_i32, %c0_i32_0 : i32, i32
  }
  func.func @transform_11(%arg0: i32, %arg1: i32) -> (i32, i32) {
    %c0_i32 = arith.constant 0 : i32
    %c0_i32_0 = arith.constant 0 : i32
    %c0_i32_1 = arith.constant 0 : i32
    return %c0_i32, %c0_i32_0 : i32, i32
  }
  func.func @transform_12(%arg0: i32, %arg1: i32) -> (i32, i32) {
    %c0_i32 = arith.constant 0 : i32
    %c0_i32_0 = arith.constant 0 : i32
    %c0_i32_1 = arith.constant 0 : i32
    return %c0_i32, %c0_i32_0 : i32, i32
  }
  func.func @transform_13(%arg0: i32, %arg1: i32) -> (i32, i32) {
    %c0_i32 = arith.constant 0 : i32
    %c0_i32_0 = arith.constant 0 : i32
    %c0_i32_1 = arith.constant 0 : i32
    return %c0_i32, %c0_i32_0 : i32, i32
  }
  func.func @transform_14(%arg0: i32, %arg1: i32) -> (i32, i32) {
    %c0_i32 = arith.constant 0 : i32
    %c0_i32_0 = arith.constant 0 : i32
    %c0_i32_1 = arith.constant 0 : i32
    return %c0_i32, %c0_i32_0 : i32, i32
  }
  func.func @transform_15(%arg0: i32, %arg1: i32) -> (i32, i32, i32) {
    %c0_i32 = arith.constant 0 : i32
    %c0_i32_0 = arith.constant 0 : i32
    return %arg0, %c0_i32, %arg1 : i32, i32, i32
  }
  func.func @transform_16(%arg0: i32, %arg1: i32) -> (i32, i32, i32) {
    %c0_i32 = arith.constant 0 : i32
    %c0_i32_0 = arith.constant 0 : i32
    return %arg0, %c0_i32, %arg1 : i32, i32, i32
  }
  func.func @transform_17(%arg0: i32, %arg1: i32) -> (i32, i32, i32) {
    %c0_i32 = arith.constant 0 : i32
    %c0_i32_0 = arith.constant 0 : i32
    return %arg0, %c0_i32, %arg1 : i32, i32, i32
  }
}

</mosaic_0001>

<llo_original>
// kernel: _ham_part_forward_impl.1
$region0: #{_ham_part_forward_impl.1}
  #allocation0 [shape = 'u32[]', space=smem, size = 0x4, offset = 0x4, fixed_abs, tag = 'smem constant byte address 0x4 - core index']
  #allocation1 [shape = 'u32[144,128]{1,0:T(1,128)}', space=vmem, size = 0x12000, scoped, tag = 'internal scratch']
  #allocation2 [shape = 'f32[1,1]{1,0:T(1,128)S(1)}', space=vmem, size = 0x200, scoped, tag = 'scoped memory for _ham_part_forward_impl.1']
  %s0 = inlined_call_operand.vmem [shape: f32[2,4,256], index: 0, kind: input, shape index: {}]
  %s1 = inlined_call_operand.vmem [shape: f32[1,128], index: 1, kind: input, shape index: {}]
  %s2 = inlined_call_operand.vmem [shape: f32[1,128], index: 2, kind: input, shape index: {}]
  %s3 = inlined_call_operand.vmem [shape: f32[1,128], index: 3, kind: input, shape index: {}]
  %s4 = inlined_call_operand.vmem [shape: f32[1,128], index: 4, kind: input, shape index: {}]
  %s5 = inlined_call_operand.vmem [shape: f32[24,4], index: 5, kind: input, shape index: {}]
  %s6 = inlined_call_operand.vmem [shape: f32[24,1], index: 6, kind: input, shape index: {}]
  %s7 = inlined_call_operand.vmem [shape: f32[24,1], index: 7, kind: input, shape index: {}]
  %s8 = inlined_call_operand.vmem [shape: f32[24,1], index: 8, kind: input, shape index: {}]
  %s9 = inlined_call_operand.vmem [shape: f32[24,24], index: 9, kind: input, shape index: {}]
  %s10 = inlined_call_operand.vmem [shape: f32[24,1], index: 10, kind: input, shape index: {}]
  %s11 = inlined_call_operand.vmem [shape: f32[12,24], index: 11, kind: input, shape index: {}]
  %s12 = inlined_call_operand.vmem [shape: f32[12,1], index: 12, kind: input, shape index: {}]
  %s13 = inlined_call_operand.vmem [shape: f32[12,1], index: 13, kind: input, shape index: {}]
  %s14 = inlined_call_operand.<no memory space> [shape: f32[1,1], index: 14, kind: input, shape index: {}]
  %s15 = inlined_call_operand.vmem [shape: f32[2,1,256], index: 15, kind: output, shape index: {0}]
  %s16 = inlined_call_operand.vmem [shape: f32[2,4,256], index: 16, kind: output, shape index: {1}]
  %s17 = inlined_call_operand.vmem [shape: f32[2,4,256], index: 17, kind: output, shape index: {2}]
  %18 = xla_tuple %s15, %s16, %s17
  %s19 = sld [smem:[#allocation0]]
  $region109: #{_ham_part_forward_impl.1} parent=0
    _
  %s21 = ssub.s32 1, %s19
  %s22 = scalar_select 0, %s21, %s19
  %v23 = vstv %s14
  %24 = vst [vmem:[#allocation2] sm:$0x1] %v23
  loop: start=0, step=1, limit=6
  $region2: #{_ham_part_forward_impl.1} parent=0 // loop_pre_header
    _
  $region3: #{_ham_part_forward_impl.1} parent=0 // loop_header
    %s26 = sphi 0, %s30
    %p27 = scmp.ge.s32.totalorder %s26, 6
    %s33 = sphi 0, %s45
    %s34 = sphi 0, %s41
    %s35 = sphi 0, %s33
    %s36 = sphi 0, %s34
    %s37 = sphi 0, %s35
    %s38 = sphi 0, %s36
    %s50 = sphi 0, %s52
    %s53 = sphi 0, %s50
    %s54 = sphi 0, %s53
    %s70 = sphi 0, %s54
    %s74 = sphi 0, %s74
    %s76 = sphi 0, %s74
    %s77 = sphi 0, %s76
    %s91 = sphi 0, %s77
    %s95 = sphi 0, %s95
    %s97 = sphi 0, %s95
    %s98 = sphi 0, %s97
    %s112 = sphi 0, %s98
    %s116 = sphi 0, %s116
    %s118 = sphi 0, %s116
    %s119 = sphi 0, %s118
    %s133 = sphi 0, %s119
    %s137 = sphi 0, %s137
    %s139 = sphi 0, %s137
    %s140 = sphi 0, %s139
    %s154 = sphi 0, %s140
    %s158 = sphi 0, %s158
    %s160 = sphi 0, %s158
    %s161 = sphi 0, %s160
    %s175 = sphi 0, %s161
    %s179 = sphi 0, %s179
    %s181 = sphi 0, %s179
    %s182 = sphi 0, %s181
    %s196 = sphi 0, %s182
    %s200 = sphi 0, %s200
    %s202 = sphi 0, %s200
    %s203 = sphi 0, %s202
    %s217 = sphi 0, %s203
    %s221 = sphi 0, %s221
    %s223 = sphi 0, %s221
    %s224 = sphi 0, %s223
    %s238 = sphi 0, %s224
    %s242 = sphi 0, %s242
    %s244 = sphi 0, %s242
    %s245 = sphi 0, %s244
    %s259 = sphi 0, %s245
    %s263 = sphi 0, %s263
    %s265 = sphi 0, %s263
    %s266 = sphi 0, %s265
    %s280 = sphi 0, %s266
    %s284 = sphi 0, %s284
    %s286 = sphi 0, %s284
    %s287 = sphi 0, %s286
    %s301 = sphi 0, %s287
    %s305 = sphi 0, %s305
    %s307 = sphi 0, %s305
    %s308 = sphi 0, %s307
    %s322 = sphi 0, %s308
    %s326 = sphi 0, %s326
    %s328 = sphi 0, %s326
    %s329 = sphi 0, %s328
    %s343 = sphi 0, %s329
    %s347 = sphi 0, %s347
    %s349 = sphi 0, %s347
    %s350 = sphi 0, %s349
    %s364 = sphi 0, %s350
    %s372 = sphi 0, %s374
    %s375 = sphi 0, %s372
    %s376 = sphi 0, %s375
    %s392 = sphi 0, %s376
    %s400 = sphi 0, %s402
    %s403 = sphi 0, %s400
    %s404 = sphi 0, %s403
    %s420 = sphi 0, %s404
    %s428 = sphi 0, %s430
    %s431 = sphi 0, %s428
    %s432 = sphi 0, %s431
    %s448 = sphi 0, %s432
  $region4: #{_ham_part_forward_impl.1} parent=0 // loop_header_branch
    %29 = sbr.rel (%p27) target = $region8
  $region5: #{_ham_part_forward_impl.1} parent=0 // loop_body
    %s31 = ssub.s32 %s26, 1
    %s32 = ssub.s32 %s26, 2
    %s39 = sadd.s32 1, %s34
    %p40 = scmp.ge.s32.totalorder %s39, 2
    %s41 = scalar_select %p40, 0, %s39
    %s42 = sadd.s32 1, %s33
    %s43 = scalar_select %p40, %s42, %s33
    %p44 = scmp.ge.s32.totalorder %s43, 2
    %s45 = scalar_select %p44, 0, %s43
    %s46 = ssub.s32 %s33, %s45
    %s47 = ssub.s32 %s34, %s41
    %s48 = sor.u32 %s46, %s47
    %p49 = scmp.eq.s32.totalorder %s48, 0
    %s51 = sadd.s32 %s50, 1
    %s52 = scalar_select %p49, %s50, %s51
    %p55 = pneg %p49
    %p56 = scmp.eq.s32.totalorder %s26, 3
    %p57 = por %p55, %p56
    %p58 = scmp.ne.s32.totalorder %s50, %s53
    %p59 = scmp.eq.s32.totalorder %s26, 0
    %p60 = por %p58, %p59
    %p61 = scmp.ne.s32.totalorder %s50, %s53
    %p62 = scmp.eq.s32.totalorder %s31, 3
    %p63 = por %p61, %p62
    %p64 = scmp.ne.s32.totalorder %s53, %s54
    %p65 = scmp.eq.s32.totalorder %s31, 0
    %p66 = por %p64, %p65
    %p67 = scmp.ne.s32.totalorder %s53, %s54
    %p68 = scmp.eq.s32.totalorder %s32, 3
    %p69 = por %p67, %p68
    %p71 = scmp.ne.s32.totalorder %s54, %s70
    %p72 = scmp.eq.s32.totalorder %s32, 0
    %p73 = por %p71, %p72
    %s75 = sadd.s32 %s74, 1
    %p78 = scmp.eq.s32.totalorder %s26, 3
    %p79 = scmp.ne.s32.totalorder %s74, %s76
    %p80 = scmp.eq.s32.totalorder %s26, 0
    %p81 = por %p79, %p80
    %p82 = scmp.ne.s32.totalorder %s74, %s76
    %p83 = scmp.eq.s32.totalorder %s31, 3
    %p84 = por %p82, %p83
    %p85 = scmp.ne.s32.totalorder %s76, %s77
    %p86 = scmp.eq.s32.totalorder %s31, 0
    %p87 = por %p85, %p86
    %p88 = scmp.ne.s32.totalorder %s76, %s77
    %p89 = scmp.eq.s32.totalorder %s32, 3
    %p90 = por %p88, %p89
    %p92 = scmp.ne.s32.totalorder %s77, %s91
    %p93 = scmp.eq.s32.totalorder %s32, 0
    %p94 = por %p92, %p93
    %s96 = sadd.s32 %s95, 1
    %p99 = scmp.eq.s32.totalorder %s26, 3
    %p100 = scmp.ne.s32.totalorder %s95, %s97
    %p101 = scmp.eq.s32.totalorder %s26, 0
    %p102 = por %p100, %p101
    %p103 = scmp.ne.s32.totalorder %s95, %s97
    %p104 = scmp.eq.s32.totalorder %s31, 3
    %p105 = por %p103, %p104
    %p106 = scmp.ne.s32.totalorder %s97, %s98
    %p107 = scmp.eq.s32.totalorder %s31, 0
    %p108 = por %p106, %p107
    %p109 = scmp.ne.s32.totalorder %s97, %s98
    %p110 = scmp.eq.s32.totalorder %s32, 3
    %p111 = por %p109, %p110
    %p113 = scmp.ne.s32.totalorder %s98, %s112
    %p114 = scmp.eq.s32.totalorder %s32, 0
    %p115 = por %p113, %p114
    %s117 = sadd.s32 %s116, 1
    %p120 = scmp.eq.s32.totalorder %s26, 3
    %p121 = scmp.ne.s32.totalorder %s116, %s118
    %p122 = scmp.eq.s32.totalorder %s26, 0
    %p123 = por %p121, %p122
    %p124 = scmp.ne.s32.totalorder %s116, %s118
    %p125 = scmp.eq.s32.totalorder %s31, 3
    %p126 = por %p124, %p125
    %p127 = scmp.ne.s32.totalorder %s118, %s119
    %p128 = scmp.eq.s32.totalorder %s31, 0
    %p129 = por %p127, %p128
    %p130 = scmp.ne.s32.totalorder %s118, %s119
    %p131 = scmp.eq.s32.totalorder %s32, 3
    %p132 = por %p130, %p131
    %p134 = scmp.ne.s32.totalorder %s119, %s133
    %p135 = scmp.eq.s32.totalorder %s32, 0
    %p136 = por %p134, %p135
    %s138 = sadd.s32 %s137, 1
    %p141 = scmp.eq.s32.totalorder %s26, 3
    %p142 = scmp.ne.s32.totalorder %s137, %s139
    %p143 = scmp.eq.s32.totalorder %s26, 0
    %p144 = por %p142, %p143
    %p145 = scmp.ne.s32.totalorder %s137, %s139
    %p146 = scmp.eq.s32.totalorder %s31, 3
    %p147 = por %p145, %p146
    %p148 = scmp.ne.s32.totalorder %s139, %s140
    %p149 = scmp.eq.s32.totalorder %s31, 0
    %p150 = por %p148, %p149
    %p151 = scmp.ne.s32.totalorder %s139, %s140
    %p152 = scmp.eq.s32.totalorder %s32, 3
    %p153 = por %p151, %p152
    %p155 = scmp.ne.s32.totalorder %s140, %s154
    %p156 = scmp.eq.s32.totalorder %s32, 0
    %p157 = por %p155, %p156
    %s159 = sadd.s32 %s158, 1
    %p162 = scmp.eq.s32.totalorder %s26, 3
    %p163 = scmp.ne.s32.totalorder %s158, %s160
    %p164 = scmp.eq.s32.totalorder %s26, 0
    %p165 = por %p163, %p164
    %p166 = scmp.ne.s32.totalorder %s158, %s160
    %p167 = scmp.eq.s32.totalorder %s31, 3
    %p168 = por %p166, %p167
    %p169 = scmp.ne.s32.totalorder %s160, %s161
    %p170 = scmp.eq.s32.totalorder %s31, 0
    %p171 = por %p169, %p170
    %p172 = scmp.ne.s32.totalorder %s160, %s161
    %p173 = scmp.eq.s32.totalorder %s32, 3
    %p174 = por %p172, %p173
    %p176 = scmp.ne.s32.totalorder %s161, %s175
    %p177 = scmp.eq.s32.totalorder %s32, 0
    %p178 = por %p176, %p177
    %s180 = sadd.s32 %s179, 1
    %p183 = scmp.eq.s32.totalorder %s26, 3
    %p184 = scmp.ne.s32.totalorder %s179, %s181
    %p185 = scmp.eq.s32.totalorder %s26, 0
    %p186 = por %p184, %p185
    %p187 = scmp.ne.s32.totalorder %s179, %s181
    %p188 = scmp.eq.s32.totalorder %s31, 3
    %p189 = por %p187, %p188
    %p190 = scmp.ne.s32.totalorder %s181, %s182
    %p191 = scmp.eq.s32.totalorder %s31, 0
    %p192 = por %p190, %p191
    %p193 = scmp.ne.s32.totalorder %s181, %s182
    %p194 = scmp.eq.s32.totalorder %s32, 3
    %p195 = por %p193, %p194
    %p197 = scmp.ne.s32.totalorder %s182, %s196
    %p198 = scmp.eq.s32.totalorder %s32, 0
    %p199 = por %p197, %p198
    %s201 = sadd.s32 %s200, 1
    %p204 = scmp.eq.s32.totalorder %s26, 3
    %p205 = scmp.ne.s32.totalorder %s200, %s202
    %p206 = scmp.eq.s32.totalorder %s26, 0
    %p207 = por %p205, %p206
    %p208 = scmp.ne.s32.totalorder %s200, %s202
    %p209 = scmp.eq.s32.totalorder %s31, 3
    %p210 = por %p208, %p209
    %p211 = scmp.ne.s32.totalorder %s202, %s203
    %p212 = scmp.eq.s32.totalorder %s31, 0
    %p213 = por %p211, %p212
    %p214 = scmp.ne.s32.totalorder %s202, %s203
    %p215 = scmp.eq.s32.totalorder %s32, 3
    %p216 = por %p214, %p215
    %p218 = scmp.ne.s32.totalorder %s203, %s217
    %p219 = scmp.eq.s32.totalorder %s32, 0
    %p220 = por %p218, %p219
    %s222 = sadd.s32 %s221, 1
    %p225 = scmp.eq.s32.totalorder %s26, 3
    %p226 = scmp.ne.s32.totalorder %s221, %s223
    %p227 = scmp.eq.s32.totalorder %s26, 0
    %p228 = por %p226, %p227
    %p229 = scmp.ne.s32.totalorder %s221, %s223
    %p230 = scmp.eq.s32.totalorder %s31, 3
    %p231 = por %p229, %p230
    %p232 = scmp.ne.s32.totalorder %s223, %s224
    %p233 = scmp.eq.s32.totalorder %s31, 0
    %p234 = por %p232, %p233
    %p235 = scmp.ne.s32.totalorder %s223, %s224
    %p236 = scmp.eq.s32.totalorder %s32, 3
    %p237 = por %p235, %p236
    %p239 = scmp.ne.s32.totalorder %s224, %s238
    %p240 = scmp.eq.s32.totalorder %s32, 0
    %p241 = por %p239, %p240
    %s243 = sadd.s32 %s242, 1
    %p246 = scmp.eq.s32.totalorder %s26, 3
    %p247 = scmp.ne.s32.totalorder %s242, %s244
    %p248 = scmp.eq.s32.totalorder %s26, 0
    %p249 = por %p247, %p248
    %p250 = scmp.ne.s32.totalorder %s242, %s244
    %p251 = scmp.eq.s32.totalorder %s31, 3
    %p252 = por %p250, %p251
    %p253 = scmp.ne.s32.totalorder %s244, %s245
    %p254 = scmp.eq.s32.totalorder %s31, 0
    %p255 = por %p253, %p254
    %p256 = scmp.ne.s32.totalorder %s244, %s245
    %p257 = scmp.eq.s32.totalorder %s32, 3
    %p258 = por %p256, %p257
    %p260 = scmp.ne.s32.totalorder %s245, %s259
    %p261 = scmp.eq.s32.totalorder %s32, 0
    %p262 = por %p260, %p261
    %s264 = sadd.s32 %s263, 1
    %p267 = scmp.eq.s32.totalorder %s26, 3
    %p268 = scmp.ne.s32.totalorder %s263, %s265
    %p269 = scmp.eq.s32.totalorder %s26, 0
    %p270 = por %p268, %p269
    %p271 = scmp.ne.s32.totalorder %s263, %s265
    %p272 = scmp.eq.s32.totalorder %s31, 3
    %p273 = por %p271, %p272
    %p274 = scmp.ne.s32.totalorder %s265, %s266
    %p275 = scmp.eq.s32.totalorder %s31, 0
    %p276 = por %p274, %p275
    %p277 = scmp.ne.s32.totalorder %s265, %s266
    %p278 = scmp.eq.s32.totalorder %s32, 3
    %p279 = por %p277, %p278
    %p281 = scmp.ne.s32.totalorder %s266, %s280
    %p282 = scmp.eq.s32.totalorder %s32, 0
    %p283 = por %p281, %p282
    %s285 = sadd.s32 %s284, 1
    %p288 = scmp.eq.s32.totalorder %s26, 3
    %p289 = scmp.ne.s32.totalorder %s284, %s286
    %p290 = scmp.eq.s32.totalorder %s26, 0
    %p291 = por %p289, %p290
    %p292 = scmp.ne.s32.totalorder %s284, %s286
    %p293 = scmp.eq.s32.totalorder %s31, 3
    %p294 = por %p292, %p293
    %p295 = scmp.ne.s32.totalorder %s286, %s287
    %p296 = scmp.eq.s32.totalorder %s31, 0
    %p297 = por %p295, %p296
    %p298 = scmp.ne.s32.totalorder %s286, %s287
    %p299 = scmp.eq.s32.totalorder %s32, 3
    %p300 = por %p298, %p299
    %p302 = scmp.ne.s32.totalorder %s287, %s301
    %p303 = scmp.eq.s32.totalorder %s32, 0
    %p304 = por %p302, %p303
    %s306 = sadd.s32 %s305, 1
    %p309 = scmp.eq.s32.totalorder %s26, 3
    %p310 = scmp.ne.s32.totalorder %s305, %s307
    %p311 = scmp.eq.s32.totalorder %s26, 0
    %p312 = por %p310, %p311
    %p313 = scmp.ne.s32.totalorder %s305, %s307
    %p314 = scmp.eq.s32.totalorder %s31, 3
    %p315 = por %p313, %p314
    %p316 = scmp.ne.s32.totalorder %s307, %s308
    %p317 = scmp.eq.s32.totalorder %s31, 0
    %p318 = por %p316, %p317
    %p319 = scmp.ne.s32.totalorder %s307, %s308
    %p320 = scmp.eq.s32.totalorder %s32, 3
    %p321 = por %p319, %p320
    %p323 = scmp.ne.s32.totalorder %s308, %s322
    %p324 = scmp.eq.s32.totalorder %s32, 0
    %p325 = por %p323, %p324
    %s327 = sadd.s32 %s326, 1
    %p330 = scmp.eq.s32.totalorder %s26, 3
    %p331 = scmp.ne.s32.totalorder %s326, %s328
    %p332 = scmp.eq.s32.totalorder %s26, 0
    %p333 = por %p331, %p332
    %p334 = scmp.ne.s32.totalorder %s326, %s328
    %p335 = scmp.eq.s32.totalorder %s31, 3
    %p336 = por %p334, %p335
    %p337 = scmp.ne.s32.totalorder %s328, %s329
    %p338 = scmp.eq.s32.totalorder %s31, 0
    %p339 = por %p337, %p338
    %p340 = scmp.ne.s32.totalorder %s328, %s329
    %p341 = scmp.eq.s32.totalorder %s32, 3
    %p342 = por %p340, %p341
    %p344 = scmp.ne.s32.totalorder %s329, %s343
    %p345 = scmp.eq.s32.totalorder %s32, 0
    %p346 = por %p344, %p345
    %s348 = sadd.s32 %s347, 1
    %p351 = scmp.eq.s32.totalorder %s26, 3
    %p352 = scmp.ne.s32.totalorder %s347, %s349
    %p353 = scmp.eq.s32.totalorder %s26, 0
    %p354 = por %p352, %p353
    %p355 = scmp.ne.s32.totalorder %s347, %s349
    %p356 = scmp.eq.s32.totalorder %s31, 3
    %p357 = por %p355, %p356
    %p358 = scmp.ne.s32.totalorder %s349, %s350
    %p359 = scmp.eq.s32.totalorder %s31, 0
    %p360 = por %p358, %p359
    %p361 = scmp.ne.s32.totalorder %s349, %s350
    %p362 = scmp.eq.s32.totalorder %s32, 3
    %p363 = por %p361, %p362
    %p365 = scmp.ne.s32.totalorder %s350, %s364
    %p366 = scmp.eq.s32.totalorder %s32, 0
    %p367 = por %p365, %p366
    %s368 = ssub.s32 %s33, %s45
    %s369 = ssub.s32 %s34, %s41
    %s370 = sor.u32 %s368, %s369
    %p371 = scmp.eq.s32.totalorder %s370, 0
    %s373 = sadd.s32 %s372, 1
    %s374 = scalar_select %p371, %s372, %s373
    %p377 = pneg %p371
    %p378 = scmp.eq.s32.totalorder %s26, 3
    %p379 = por %p377, %p378
    %p380 = scmp.ne.s32.totalorder %s372, %s375
    %p381 = scmp.eq.s32.totalorder %s26, 0
    %p382 = por %p380, %p381
    %p383 = scmp.ne.s32.totalorder %s372, %s375
    %p384 = scmp.eq.s32.totalorder %s31, 3
    %p385 = por %p383, %p384
    %p386 = scmp.ne.s32.totalorder %s375, %s376
    %p387 = scmp.eq.s32.totalorder %s31, 0
    %p388 = por %p386, %p387
    %p389 = scmp.ne.s32.totalorder %s375, %s376
    %p390 = scmp.eq.s32.totalorder %s32, 3
    %p391 = por %p389, %p390
    %p393 = scmp.ne.s32.totalorder %s376, %s392
    %p394 = scmp.eq.s32.totalorder %s32, 0
    %p395 = por %p393, %p394
    %s396 = ssub.s32 %s33, %s45
    %s397 = ssub.s32 %s34, %s41
    %s398 = sor.u32 %s396, %s397
    %p399 = scmp.eq.s32.totalorder %s398, 0
    %s401 = sadd.s32 %s400, 1
    %s402 = scalar_select %p399, %s400, %s401
    %p405 = pneg %p399
    %p406 = scmp.eq.s32.totalorder %s26, 3
    %p407 = por %p405, %p406
    %p408 = scmp.ne.s32.totalorder %s400, %s403
    %p409 = scmp.eq.s32.totalorder %s26, 0
    %p410 = por %p408, %p409
    %p411 = scmp.ne.s32.totalorder %s400, %s403
    %p412 = scmp.eq.s32.totalorder %s31, 3
    %p413 = por %p411, %p412
    %p414 = scmp.ne.s32.totalorder %s403, %s404
    %p415 = scmp.eq.s32.totalorder %s31, 0
    %p416 = por %p414, %p415
    %p417 = scmp.ne.s32.totalorder %s403, %s404
    %p418 = scmp.eq.s32.totalorder %s32, 3
    %p419 = por %p417, %p418
    %p421 = scmp.ne.s32.totalorder %s404, %s420
    %p422 = scmp.eq.s32.totalorder %s32, 0
    %p423 = por %p421, %p422
    %s424 = ssub.s32 %s33, %s45
    %s425 = ssub.s32 %s34, %s41
    %s426 = sor.u32 %s424, %s425
    %p427 = scmp.eq.s32.totalorder %s426, 0
    %s429 = sadd.s32 %s428, 1
    %s430 = scalar_select %p427, %s428, %s429
    %p433 = pneg %p427
    %p434 = scmp.eq.s32.totalorder %s26, 3
    %p435 = por %p433, %p434
    %p436 = scmp.ne.s32.totalorder %s428, %s431
    %p437 = scmp.eq.s32.totalorder %s26, 0
    %p438 = por %p436, %p437
    %p439 = scmp.ne.s32.totalorder %s428, %s431
    %p440 = scmp.eq.s32.totalorder %s31, 3
    %p441 = por %p439, %p440
    %p442 = scmp.ne.s32.totalorder %s431, %s432
    %p443 = scmp.eq.s32.totalorder %s31, 0
    %p444 = por %p442, %p443
    %p445 = scmp.ne.s32.totalorder %s431, %s432
    %p446 = scmp.eq.s32.totalorder %s32, 3
    %p447 = por %p445, %p446
    %p449 = scmp.ne.s32.totalorder %s432, %s448
    %p450 = scmp.eq.s32.totalorder %s32, 0
    %p451 = por %p449, %p450
    %p452 = scmp.le.s32.totalorder 1, %s26
    %p453 = scmp.lt.s32.totalorder %s26, 5
    %p454 = pnand %p452, %p453
    %p455 = pneg %p454
    // Predicated region
    $region9: #{_ham_part_forward_impl.1} parent=5 // pred_check
      _
    $region10: #{_ham_part_forward_impl.1} parent=5 // pred_check_branch
      %457 = sbr.rel (%p454) target = $region12
    $region11: #{_ham_part_forward_impl.1} parent=5 // pred_region
      %s458 = ssub.s32 %s26, 1
      // Predicated region
      $region13: #{_ham_part_forward_impl.1} parent=11 // pred_check
        %p459 = pneg %p87
      $region14: #{_ham_part_forward_impl.1} parent=11 // pred_check_branch
        %461 = sbr.rel (%p459) target = $region16
      $region15: #{_ham_part_forward_impl.1} parent=11 // pred_region
        _
      $region16: #{_ham_part_forward_impl.1} parent=11 // pred_fallthru
        _
      // Predicated region
      $region17: #{_ham_part_forward_impl.1} parent=11 // pred_check
        %p462 = pneg %p108
      $region18: #{_ham_part_forward_impl.1} parent=11 // pred_check_branch
        %464 = sbr.rel (%p462) target = $region20
      $region19: #{_ham_part_forward_impl.1} parent=11 // pred_region
        _
      $region20: #{_ham_part_forward_impl.1} parent=11 // pred_fallthru
        _
      // Predicated region
      $region21: #{_ham_part_forward_impl.1} parent=11 // pred_check
        %p465 = pneg %p129
      $region22: #{_ham_part_forward_impl.1} parent=11 // pred_check_branch
        %467 = sbr.rel (%p465) target = $region24
      $region23: #{_ham_part_forward_impl.1} parent=11 // pred_region
        _
      $region24: #{_ham_part_forward_impl.1} parent=11 // pred_fallthru
        _
      // Predicated region
      $region25: #{_ham_part_forward_impl.1} parent=11 // pred_check
        %p468 = pneg %p150
      $region26: #{_ham_part_forward_impl.1} parent=11 // pred_check_branch
        %470 = sbr.rel (%p468) target = $region28
      $region27: #{_ham_part_forward_impl.1} parent=11 // pred_region
        _
      $region28: #{_ham_part_forward_impl.1} parent=11 // pred_fallthru
        _
      // Predicated region
      $region29: #{_ham_part_forward_impl.1} parent=11 // pred_check
        %p471 = pneg %p171
      $region30: #{_ham_part_forward_impl.1} parent=11 // pred_check_branch
        %473 = sbr.rel (%p471) target = $region32
      $region31: #{_ham_part_forward_impl.1} parent=11 // pred_region
        _
      $region32: #{_ham_part_forward_impl.1} parent=11 // pred_fallthru
        _
      // Predicated region
      $region33: #{_ham_part_forward_impl.1} parent=11 // pred_check
        %p474 = pneg %p192
      $region34: #{_ham_part_forward_impl.1} parent=11 // pred_check_branch
        %476 = sbr.rel (%p474) target = $region36
      $region35: #{_ham_part_forward_impl.1} parent=11 // pred_region
        _
      $region36: #{_ham_part_forward_impl.1} parent=11 // pred_fallthru
        _
      // Predicated region
      $region37: #{_ham_part_forward_impl.1} parent=11 // pred_check
        %p477 = pneg %p213
      $region38: #{_ham_part_forward_impl.1} parent=11 // pred_check_branch
        %479 = sbr.rel (%p477) target = $region40
      $region39: #{_ham_part_forward_impl.1} parent=11 // pred_region
        _
      $region40: #{_ham_part_forward_impl.1} parent=11 // pred_fallthru
        _
      // Predicated region
      $region41: #{_ham_part_forward_impl.1} parent=11 // pred_check
        %p480 = pneg %p234
      $region42: #{_ham_part_forward_impl.1} parent=11 // pred_check_branch
        %482 = sbr.rel (%p480) target = $region44
      $region43: #{_ham_part_forward_impl.1} parent=11 // pred_region
        _
      $region44: #{_ham_part_forward_impl.1} parent=11 // pred_fallthru
        _
      // Predicated region
      $region45: #{_ham_part_forward_impl.1} parent=11 // pred_check
        %p483 = pneg %p255
      $region46: #{_ham_part_forward_impl.1} parent=11 // pred_check_branch
        %485 = sbr.rel (%p483) target = $region48
      $region47: #{_ham_part_forward_impl.1} parent=11 // pred_region
        _
      $region48: #{_ham_part_forward_impl.1} parent=11 // pred_fallthru
        _
      // Predicated region
      $region49: #{_ham_part_forward_impl.1} parent=11 // pred_check
        %p486 = pneg %p276
      $region50: #{_ham_part_forward_impl.1} parent=11 // pred_check_branch
        %488 = sbr.rel (%p486) target = $region52
      $region51: #{_ham_part_forward_impl.1} parent=11 // pred_region
        _
      $region52: #{_ham_part_forward_impl.1} parent=11 // pred_fallthru
        _
      // Predicated region
      $region53: #{_ham_part_forward_impl.1} parent=11 // pred_check
        %p489 = pneg %p297
      $region54: #{_ham_part_forward_impl.1} parent=11 // pred_check_branch
        %491 = sbr.rel (%p489) target = $region56
      $region55: #{_ham_part_forward_impl.1} parent=11 // pred_region
        _
      $region56: #{_ham_part_forward_impl.1} parent=11 // pred_fallthru
        _
      // Predicated region
      $region57: #{_ham_part_forward_impl.1} parent=11 // pred_check
        %p492 = pneg %p318
      $region58: #{_ham_part_forward_impl.1} parent=11 // pred_check_branch
        %494 = sbr.rel (%p492) target = $region60
      $region59: #{_ham_part_forward_impl.1} parent=11 // pred_region
        _
      $region60: #{_ham_part_forward_impl.1} parent=11 // pred_fallthru
        _
      // Predicated region
      $region61: #{_ham_part_forward_impl.1} parent=11 // pred_check
        %p495 = pneg %p339
      $region62: #{_ham_part_forward_impl.1} parent=11 // pred_check_branch
        %497 = sbr.rel (%p495) target = $region64
      $region63: #{_ham_part_forward_impl.1} parent=11 // pred_region
        _
      $region64: #{_ham_part_forward_impl.1} parent=11 // pred_fallthru
        _
      // Predicated region
      $region65: #{_ham_part_forward_impl.1} parent=11 // pred_check
        %p498 = pneg %p360
      $region66: #{_ham_part_forward_impl.1} parent=11 // pred_check_branch
        %500 = sbr.rel (%p498) target = $region68
      $region67: #{_ham_part_forward_impl.1} parent=11 // pred_region
        _
      $region68: #{_ham_part_forward_impl.1} parent=11 // pred_fallthru
        _
    $region12: #{_ham_part_forward_impl.1} parent=5 // pred_fallthru
      _
    %p501 = scmp.lt.s32.totalorder %s26, 4
    // Predicated region
    $region69: #{_ham_part_forward_impl.1} parent=5 // pred_check
      %p502 = pneg %p501
    $region70: #{_ham_part_forward_impl.1} parent=5 // pred_check_branch
      %504 = sbr.rel (%p502) target = $region72
    $region71: #{_ham_part_forward_impl.1} parent=5 // pred_region
      // Predicated region
      $region73: #{_ham_part_forward_impl.1} parent=71 // pred_check
        %p505 = pneg %p60
      $region74: #{_ham_part_forward_impl.1} parent=71 // pred_check_branch
        %507 = sbr.rel (%p505) target = $region76
      $region75: #{_ham_part_forward_impl.1} parent=71 // pred_region
        %p508 = scmp.lt.s32.totalorder %s33, 1
        %s509 = scalar_select %p508, %s33, 1
        %p510 = scmp.lt.s32.totalorder %s34, 1
        %s511 = scalar_select %p510, %s34, 1
        %s512 = smul.addr %s509, 2
        %s513 = sadd.s32 %s511, %s512
        %s514 = smul.addr %s513, 4
        %s515 = scalar_lea.vmem %s0, %s514
      $region76: #{_ham_part_forward_impl.1} parent=71 // pred_fallthru
        _
    $region72: #{_ham_part_forward_impl.1} parent=5 // pred_fallthru
      _
    %p516 = scmp.le.s32.totalorder 1, %s26
    %p517 = scmp.lt.s32.totalorder %s26, 5
    %p518 = pnand %p516, %p517
    %p519 = pneg %p518
    // Predicated region
    $region77: #{_ham_part_forward_impl.1} parent=5 // pred_check
      _
    $region78: #{_ham_part_forward_impl.1} parent=5 // pred_check_branch
      %521 = sbr.rel (%p518) target = $region80
    $region79: #{_ham_part_forward_impl.1} parent=5 // pred_region
      %s522 = ssub.s32 %s26, 1
      %p523 = scmp.lt.s32.totalorder %s35, 1
      %s524 = scalar_select %p523, %s35, 1
      %p525 = scmp.lt.s32.totalorder %s36, 1
      %s526 = scalar_select %p525, %s36, 1
      %s527 = smul.addr %s524, 2
      %s528 = sadd.s32 %s526, %s527
      %s529 = smul.addr %s528, 4
      %s530 = scalar_lea.vmem %s0, %s529
      %p531 = pneg %p66
      %p532 = pneg %p63
      %p533 = pneg %p87
      %p534 = pneg %p84
      %p535 = pneg %p108
      %p536 = pneg %p105
      %p537 = pneg %p129
      %p538 = pneg %p126
      %p539 = pneg %p150
      %p540 = pneg %p147
      %p541 = pneg %p171
      %p542 = pneg %p168
      %p543 = pneg %p192
      %p544 = pneg %p189
      %p545 = pneg %p213
      %p546 = pneg %p210
      %p547 = pneg %p234
      %p548 = pneg %p231
      %p549 = pneg %p255
      %p550 = pneg %p252
      %p551 = pneg %p276
      %p552 = pneg %p273
      %p553 = pneg %p297
      %p554 = pneg %p294
      %p555 = pneg %p318
      %p556 = pneg %p315
      %p557 = pneg %p339
      %p558 = pneg %p336
      %p559 = pneg %p360
      %p560 = pneg %p357
      %p561 = pneg %p388
      %p562 = pneg %p385
      %p563 = scmp.lt.s32.totalorder %s35, 1
      %s564 = scalar_select %p563, %s35, 1
      %p565 = scmp.lt.s32.totalorder %s36, 1
      %s566 = scalar_select %p565, %s36, 1
      %s567 = smul.addr %s564, 2
      %s568 = sadd.s32 %s566, %s567
      %s569 = scalar_lea.vmem %s15, %s568
      %p570 = pneg %p416
      %p571 = pneg %p413
      %p572 = scmp.lt.s32.totalorder %s35, 1
      %s573 = scalar_select %p572, %s35, 1
      %p574 = scmp.lt.s32.totalorder %s36, 1
      %s575 = scalar_select %p574, %s36, 1
      %s576 = smul.addr %s573, 2
      %s577 = sadd.s32 %s575, %s576
      %s578 = smul.addr %s577, 4
      %s579 = scalar_lea.vmem %s16, %s578
      %p580 = pneg %p444
      %p581 = pneg %p441
      %p582 = scmp.lt.s32.totalorder %s35, 1
      %s583 = scalar_select %p582, %s35, 1
      %p584 = scmp.lt.s32.totalorder %s36, 1
      %s585 = scalar_select %p584, %s36, 1
      %s586 = smul.addr %s583, 2
      %s587 = sadd.s32 %s585, %s586
      %s588 = smul.addr %s587, 4
      %s589 = scalar_lea.vmem %s17, %s588
      %p590 = scmp.lt.s32.totalorder %s35, 1
      %s591 = scalar_select %p590, %s35, 1
      %p592 = scmp.lt.s32.totalorder %s36, 1
      %s593 = scalar_select %p592, %s36, 1
      %s594 = smul.addr %s591, 2
      %s595 = sadd.s32 %s593, %s594
      %s596 = smul.addr %s595, 4
      %s597 = scalar_lea.vmem %s0, %s596
      %p598 = scmp.lt.s32.totalorder %s35, 1
      %s599 = scalar_select %p598, %s35, 1
      %p600 = scmp.lt.s32.totalorder %s36, 1
      %s601 = scalar_select %p600, %s36, 1
      %s602 = smul.addr %s599, 2
      %s603 = sadd.s32 %s601, %s602
      %s604 = scalar_lea.vmem %s15, %s603
      %p605 = scmp.lt.s32.totalorder %s35, 1
      %s606 = scalar_select %p605, %s35, 1
      %p607 = scmp.lt.s32.totalorder %s36, 1
      %s608 = scalar_select %p607, %s36, 1
      %s609 = smul.addr %s606, 2
      %s610 = sadd.s32 %s608, %s609
      %s611 = smul.addr %s610, 4
      %s612 = scalar_lea.vmem %s16, %s611
      %p613 = scmp.lt.s32.totalorder %s35, 1
      %s614 = scalar_select %p613, %s35, 1
      %p615 = scmp.lt.s32.totalorder %s36, 1
      %s616 = scalar_select %p615, %s36, 1
      %s617 = smul.addr %s614, 2
      %s618 = sadd.s32 %s616, %s617
      %s619 = smul.addr %s618, 4
      %s620 = scalar_lea.vmem %s17, %s619
      %v621 = vld [vmem:[%s597] sm:$0xf]
      %vm622 = vcmask 1043456
      %v623 = vsel %vm622, %v621, 0.0
      %v624 = vrot.slane %v623, 4
      %v625 = vadd.f32 %v623, %v624
      %v626 = vrot.slane %v625, 2
      %v627 = vadd.f32 %v625, %v626
      %v628 = vrot.slane %v627, 1
      %v629 = vadd.f32 %v627, %v628
      %630 = vrot.lane.b32.xlu0 %v629, 120
      %v631 = vpop.permute.xlu0 %630
      %632 = vrot.lane.b32.xlu0 %v629, 8
      %v633 = vpop.permute.xlu0 %632
      %634 = vrot.lane.b32.xlu0 %v629, 127
      %v635 = vpop.permute.xlu0 %634
      %636 = vrot.lane.b32.xlu0 %v629, 1
      %v637 = vpop.permute.xlu0 %636
      %v638 = vld [vmem:[%s1] sm:$0x1]
      %v639 = vmul.f32 %v638, %v631
      %v640 = vld [vmem:[%s2] sm:$0x1]
      %v641 = vmul.f32 %v640, %v633
      %v642 = vsub.f32 %v639, %v641
      %v643 = vld [vmem:[%s3] sm:$0x1]
      %v644 = vmul.f32 %v643, %v635
      %v645 = vld [vmem:[%s4] sm:$0x1]
      %v646 = vmul.f32 %v645, %v637
      %v647 = vsub.f32 %v644, %v646
      %v649 = vlaneseq
      %v650 = vshrl.u32 %v649, 7
      %v651 = vsub.s32 0, %v650
      %v652 = vrot.slane %v642, %v651
      %654 = vst [vmem:[%s612] sm:$0xf] %v652
      %v656 = vlaneseq
      %v657 = vshrl.u32 %v656, 7
      %v658 = vsub.s32 0, %v657
      %v659 = vrot.slane %v647, %v658
      %661 = vst [vmem:[%s620] sm:$0xf] %v659
      %v662 = vld [vmem:[%s597] sm:$0xf]
      %v663 = vld [vmem:[%s612] sm:$0x1]
      %v664 = vld [vmem:[%s620] sm:$0x1]
      %v665 = vld [vmem:[%s5] sm:$0xff]
      %v666 = vld [vmem:[%s5 + $0x8] sm:$0xff]
      %v667 = vld [vmem:[%s5 + $0x10] sm:$0xff]
      %v668 = vld [vmem:[%s6] sm:$0xff]
      %v669 = vld [vmem:[%s6 + $0x8] sm:$0xff]
      %v670 = vld [vmem:[%s6 + $0x10] sm:$0xff]
      %672 = vset.pattern.permute.xlu0 0
      %673 = vperm.xlu0 %672, %v668
      %v674 = vpop.permute.xlu0 %673
      %677 = vset.pattern.permute.xlu0 0
      %678 = vperm.xlu0 %677, %v669
      %v679 = vpop.permute.xlu0 %678
      %682 = vset.pattern.permute.xlu0 0
      %683 = vperm.xlu0 %682, %v670
      %v684 = vpop.permute.xlu0 %683
      %v686 = vlaneseq
      %v687 = vshrl.u32 %v686, 7
      %v688 = vsub.s32 0, %v687
      %v689 = vrot.slane %v663, %v688
      %v690 = vmul.f32 %v674, %v689
      %v691 = vmul.f32 %v679, %v689
      %v692 = vmul.f32 %v684, %v689
      %vm693 = vcmask 31744
      %v695 = vsel %vm693, %v665, 0
      %v698 = vsel %vm693, %v666, 0
      %v701 = vsel %vm693, %v667, 0
      %v704 = vsel %vm622, %v662, 0
      %706 = vmatprep.subr.mxu0 0.0
      %707 = vmatpush1.msra.mxu0 %v704
      %708 = vmatprep.subr.mxu0 0.0
      %709 = vmatpush1.msra.mxu0 0.0
      %710 = vmatprep.subr.mxu0 0.0
      %711 = vmatpush1.msra.mxu0 0.0
      %712 = vmatprep.subr.mxu0 0.0
      %713 = vmatpush1.msra.mxu0 0.0
      %714 = vmatprep.subr.mxu0 0.0
      %715 = vmatpush1.msra.mxu0 0.0
      %716 = vmatprep.subr.mxu0 0.0
      %717 = vmatpush1.msra.mxu0 0.0
      %718 = vmatprep.subr.mxu0 0.0
      %719 = vmatpush1.msra.mxu0 0.0
      %720 = vmatprep.subr.mxu0 0.0
      %721 = vmatpush1.msra.mxu0 0.0
      %722 = vmatprep.subr.mxu0 0.0
      %723 = vmatpush1.msra.mxu0 0.0
      %724 = vmatprep.subr.mxu0 0.0
      %725 = vmatpush1.msra.mxu0 0.0
      %726 = vmatprep.subr.mxu0 0.0
      %727 = vmatpush1.msra.mxu0 0.0
      %728 = vmatprep.subr.mxu0 0.0
      %729 = vmatpush1.msra.mxu0 0.0
      %730 = vmatprep.subr.mxu0 0.0
      %731 = vmatpush1.msra.mxu0 0.0
      %732 = vmatprep.subr.mxu0 0.0
      %733 = vmatpush1.msra.mxu0 0.0
      %734 = vmatprep.subr.mxu0 0.0
      %735 = vmatpush1.msra.mxu0 0.0
      %736 = vmatprep.subr.mxu0 0.0
      %737 = vmatpush1.msra.mxu0 0.0
      %738 = vmatprep.subr.mxu0 0.0
      %739 = vmatpush1.msra.mxu0 0.0
      %740 = vmatprep.subr.mxu0 0.0
      %741 = vmatpush1.msra.mxu0 0.0
      %742 = vmatprep.subr.mxu0 0.0
      %743 = vmatpush1.msra.mxu0 0.0
      %744 = vmatprep.subr.mxu0 0.0
      %745 = vmatpush1.msra.mxu0 0.0
      %746 = vmatprep.subr.mxu0 0.0
      %747 = vmatpush1.msra.mxu0 0.0
      %748 = vmatprep.subr.mxu0 0.0
      %749 = vmatpush1.msra.mxu0 0.0
      %750 = vmatprep.subr.mxu0 0.0
      %751 = vmatpush1.msra.mxu0 0.0
      %752 = vmatprep.subr.mxu0 0.0
      %753 = vmatpush1.msra.mxu0 0.0
      %754 = vmatprep.subr.mxu0 0.0
      %755 = vmatpush1.msra.mxu0 0.0
      %756 = vmatprep.subr.mxu0 0.0
      %757 = vmatpush1.msra.mxu0 0.0
      %758 = vmatprep.subr.mxu0 0.0
      %759 = vmatpush1.msra.mxu0 0.0
      %760 = vmatprep.subr.mxu0 0.0
      %761 = vmatpush1.msra.mxu0 0.0
      %762 = vmatprep.subr.mxu0 0.0
      %763 = vmatpush1.msra.mxu0 0.0
      %764 = vmatprep.subr.mxu0 0.0
      %765 = vmatpush1.msra.mxu0 0.0
      %766 = vmatprep.subr.mxu0 0.0
      %767 = vmatpush1.msra.mxu0 0.0
      %768 = vmatprep.subr.mxu0 0.0
      %769 = vmatpush1.msra.mxu0 0.0
      %770 = vmatprep.mubr.f32.mxu0 0.0
      %771 = vmatmul.mubr.f32.gmra.mrb[0].mxu0 %v695
      %v772 = vpop.f32.mrb[0].mxu0
      %v773 = vadd.f32 %v690, %v772
      %v774 = vpop.f32.mrb[0].mxu0
      %775 = vmatprep.mubr.f32.mxu0 0.0
      %776 = vmatmul.mubr.f32.gmra.mrb[0].mxu0 %v698
      %v777 = vpop.f32.mrb[0].mxu0
      %v778 = vadd.f32 %v691, %v777
      %v779 = vpop.f32.mrb[0].mxu0
      %780 = vmatprep.mubr.f32.mxu0 0.0
      %781 = vmatmul.mubr.f32.gmra.mrb[0].mxu0 %v701
      %v782 = vpop.f32.mrb[0].mxu0
      %v783 = vadd.f32 %v692, %v782
      %v784 = vpop.f32.mrb[0].mxu0
      %785 = vdwg.mxu0
      %v786 = vld [vmem:[%s7] sm:$0xff]
      %v787 = vld [vmem:[%s7 + $0x8] sm:$0xff]
      %v788 = vld [vmem:[%s7 + $0x10] sm:$0xff]
      %790 = vset.pattern.permute.xlu0 0
      %791 = vperm.xlu0 %790, %v786
      %v792 = vpop.permute.xlu0 %791
      %795 = vset.pattern.permute.xlu0 0
      %796 = vperm.xlu0 %795, %v787
      %v797 = vpop.permute.xlu0 %796
      %800 = vset.pattern.permute.xlu0 0
      %801 = vperm.xlu0 %800, %v788
      %v802 = vpop.permute.xlu0 %801
      %v804 = vlaneseq
      %v805 = vshrl.u32 %v804, 7
      %v806 = vsub.s32 0, %v805
      %v807 = vrot.slane %v664, %v806
      %v808 = vmul.f32 %v792, %v807
      %v809 = vmul.f32 %v797, %v807
      %v810 = vmul.f32 %v802, %v807
      %v811 = vadd.f32 %v773, %v808
      %v812 = vadd.f32 %v778, %v809
      %v813 = vadd.f32 %v783, %v810
      %v814 = vld [vmem:[%s8] sm:$0xff]
      %v815 = vld [vmem:[%s8 + $0x8] sm:$0xff]
      %v816 = vld [vmem:[%s8 + $0x10] sm:$0xff]
      %818 = vset.pattern.permute.xlu0 0
      %819 = vperm.xlu0 %818, %v814
      %v820 = vpop.permute.xlu0 %819
      %823 = vset.pattern.permute.xlu0 0
      %824 = vperm.xlu0 %823, %v815
      %v825 = vpop.permute.xlu0 %824
      %828 = vset.pattern.permute.xlu0 0
      %829 = vperm.xlu0 %828, %v816
      %v830 = vpop.permute.xlu0 %829
      %v832 = vadd.f32 %v811, %v820
      %v833 = vadd.f32 %v812, %v825
      %v834 = vadd.f32 %v813, %v830
      %v835 = vmax.f32 %v832, 0.0
      %v836 = vmax.f32 %v833, 0.0
      %v837 = vmax.f32 %v834, 0.0
      %v838 = vld [vmem:[%s9] sm:$0xff]
      %v839 = vld [vmem:[%s9 + $0x8] sm:$0xff]
      %v840 = vld [vmem:[%s9 + $0x10] sm:$0xff]
      %v841 = vld [vmem:[%s10] sm:$0xff]
      %v842 = vld [vmem:[%s10 + $0x8] sm:$0xff]
      %v843 = vld [vmem:[%s10 + $0x10] sm:$0xff]
      %845 = vset.pattern.permute.xlu0 0
      %846 = vperm.xlu0 %845, %v841
      %v847 = vpop.permute.xlu0 %846
      %850 = vset.pattern.permute.xlu0 0
      %851 = vperm.xlu0 %850, %v842
      %v852 = vpop.permute.xlu0 %851
      %855 = vset.pattern.permute.xlu0 0
      %856 = vperm.xlu0 %855, %v843
      %v857 = vpop.permute.xlu0 %856
      %vm859 = vcmask 195584
      %v861 = vsel %vm859, %v838, 0
      %v864 = vsel %vm859, %v839, 0
      %v867 = vsel %vm859, %v840, 0
      %869 = vmatprep.subr.mxu0 0.0
      %870 = vmatpush1.msra.mxu0 %v835
      %871 = vmatprep.subr.mxu0 0.0
      %872 = vmatpush1.msra.mxu0 %v836
      %873 = vmatprep.subr.mxu0 0.0
      %874 = vmatpush1.msra.mxu0 %v837
      %875 = vmatprep.subr.mxu0 0.0
      %876 = vmatpush1.msra.mxu0 0.0
      %877 = vmatprep.subr.mxu0 0.0
      %878 = vmatpush1.msra.mxu0 0.0
      %879 = vmatprep.subr.mxu0 0.0
      %880 = vmatpush1.msra.mxu0 0.0
      %881 = vmatprep.subr.mxu0 0.0
      %882 = vmatpush1.msra.mxu0 0.0
      %883 = vmatprep.subr.mxu0 0.0
      %884 = vmatpush1.msra.mxu0 0.0
      %885 = vmatprep.subr.mxu0 0.0
      %886 = vmatpush1.msra.mxu0 0.0
      %887 = vmatprep.subr.mxu0 0.0
      %888 = vmatpush1.msra.mxu0 0.0
      %889 = vmatprep.subr.mxu0 0.0
      %890 = vmatpush1.msra.mxu0 0.0
      %891 = vmatprep.subr.mxu0 0.0
      %892 = vmatpush1.msra.mxu0 0.0
      %893 = vmatprep.subr.mxu0 0.0
      %894 = vmatpush1.msra.mxu0 0.0
      %895 = vmatprep.subr.mxu0 0.0
      %896 = vmatpush1.msra.mxu0 0.0
      %897 = vmatprep.subr.mxu0 0.0
      %898 = vmatpush1.msra.mxu0 0.0
      %899 = vmatprep.subr.mxu0 0.0
      %900 = vmatpush1.msra.mxu0 0.0
      %901 = vmatprep.subr.mxu0 0.0
      %902 = vmatpush1.msra.mxu0 0.0
      %903 = vmatprep.subr.mxu0 0.0
      %904 = vmatpush1.msra.mxu0 0.0
      %905 = vmatprep.subr.mxu0 0.0
      %906 = vmatpush1.msra.mxu0 0.0
      %907 = vmatprep.subr.mxu0 0.0
      %908 = vmatpush1.msra.mxu0 0.0
      %909 = vmatprep.subr.mxu0 0.0
      %910 = vmatpush1.msra.mxu0 0.0
      %911 = vmatprep.subr.mxu0 0.0
      %912 = vmatpush1.msra.mxu0 0.0
      %913 = vmatprep.subr.mxu0 0.0
      %914 = vmatpush1.msra.mxu0 0.0
      %915 = vmatprep.subr.mxu0 0.0
      %916 = vmatpush1.msra.mxu0 0.0
      %917 = vmatprep.subr.mxu0 0.0
      %918 = vmatpush1.msra.mxu0 0.0
      %919 = vmatprep.subr.mxu0 0.0
      %920 = vmatpush1.msra.mxu0 0.0
      %921 = vmatprep.subr.mxu0 0.0
      %922 = vmatpush1.msra.mxu0 0.0
      %923 = vmatprep.subr.mxu0 0.0
      %924 = vmatpush1.msra.mxu0 0.0
      %925 = vmatprep.subr.mxu0 0.0
      %926 = vmatpush1.msra.mxu0 0.0
      %927 = vmatprep.subr.mxu0 0.0
      %928 = vmatpush1.msra.mxu0 0.0
      %929 = vmatprep.subr.mxu0 0.0
      %930 = vmatpush1.msra.mxu0 0.0
      %931 = vmatprep.subr.mxu0 0.0
      %932 = vmatpush1.msra.mxu0 0.0
      %933 = vmatprep.mubr.f32.mxu0 0.0
      %934 = vmatmul.mubr.f32.gmra.mrb[0].mxu0 %v861
      %v935 = vpop.f32.mrb[0].mxu0
      %v936 = vadd.f32 %v847, %v935
      %v937 = vpop.f32.mrb[0].mxu0
      %938 = vmatprep.mubr.f32.mxu0 0.0
      %939 = vmatmul.mubr.f32.gmra.mrb[0].mxu0 %v864
      %v940 = vpop.f32.mrb[0].mxu0
      %v941 = vadd.f32 %v852, %v940
      %v942 = vpop.f32.mrb[0].mxu0
      %943 = vmatprep.mubr.f32.mxu0 0.0
      %944 = vmatmul.mubr.f32.gmra.mrb[0].mxu0 %v867
      %v945 = vpop.f32.mrb[0].mxu0
      %v946 = vadd.f32 %v857, %v945
      %v947 = vpop.f32.mrb[0].mxu0
      %948 = vdwg.mxu0
      %v949 = vmax.f32 %v936, 0.0
      %v950 = vmax.f32 %v941, 0.0
      %v951 = vmax.f32 %v946, 0.0
      %v952 = vld [vmem:[%s11] sm:$0xff]
      %v953 = vld [vmem:[%s11 + $0x8] sm:$0xf]
      %v954 = vld [vmem:[%s12] sm:$0xff]
      %v955 = vld [vmem:[%s12 + $0x8] sm:$0xf]
      %957 = vset.pattern.permute.xlu0 0
      %958 = vperm.xlu0 %957, %v954
      %v959 = vpop.permute.xlu0 %958
      %962 = vset.pattern.permute.xlu0 0
      %963 = vperm.xlu0 %962, %v955
      %v964 = vpop.permute.xlu0 %963
      %v967 = vsel %vm859, %v952, 0
      %v970 = vsel %vm859, %v953, 0
      %972 = vmatprep.subr.mxu0 0.0
      %973 = vmatpush1.msra.mxu0 %v949
      %974 = vmatprep.subr.mxu0 0.0
      %975 = vmatpush1.msra.mxu0 %v950
      %976 = vmatprep.subr.mxu0 0.0
      %977 = vmatpush1.msra.mxu0 %v951
      %978 = vmatprep.subr.mxu0 0.0
      %979 = vmatpush1.msra.mxu0 0.0
      %980 = vmatprep.subr.mxu0 0.0
      %981 = vmatpush1.msra.mxu0 0.0
      %982 = vmatprep.subr.mxu0 0.0
      %983 = vmatpush1.msra.mxu0 0.0
      %984 = vmatprep.subr.mxu0 0.0
      %985 = vmatpush1.msra.mxu0 0.0
      %986 = vmatprep.subr.mxu0 0.0
      %987 = vmatpush1.msra.mxu0 0.0
      %988 = vmatprep.subr.mxu0 0.0
      %989 = vmatpush1.msra.mxu0 0.0
      %990 = vmatprep.subr.mxu0 0.0
      %991 = vmatpush1.msra.mxu0 0.0
      %992 = vmatprep.subr.mxu0 0.0
      %993 = vmatpush1.msra.mxu0 0.0
      %994 = vmatprep.subr.mxu0 0.0
      %995 = vmatpush1.msra.mxu0 0.0
      %996 = vmatprep.subr.mxu0 0.0
      %997 = vmatpush1.msra.mxu0 0.0
      %998 = vmatprep.subr.mxu0 0.0
      %999 = vmatpush1.msra.mxu0 0.0
      %1000 = vmatprep.subr.mxu0 0.0
      %1001 = vmatpush1.msra.mxu0 0.0
      %1002 = vmatprep.subr.mxu0 0.0
      %1003 = vmatpush1.msra.mxu0 0.0
      %1004 = vmatprep.subr.mxu0 0.0
      %1005 = vmatpush1.msra.mxu0 0.0
      %1006 = vmatprep.subr.mxu0 0.0
      %1007 = vmatpush1.msra.mxu0 0.0
      %1008 = vmatprep.subr.mxu0 0.0
      %1009 = vmatpush1.msra.mxu0 0.0
      %1010 = vmatprep.subr.mxu0 0.0
      %1011 = vmatpush1.msra.mxu0 0.0
      %1012 = vmatprep.subr.mxu0 0.0
      %1013 = vmatpush1.msra.mxu0 0.0
      %1014 = vmatprep.subr.mxu0 0.0
      %1015 = vmatpush1.msra.mxu0 0.0
      %1016 = vmatprep.subr.mxu0 0.0
      %1017 = vmatpush1.msra.mxu0 0.0
      %1018 = vmatprep.subr.mxu0 0.0
      %1019 = vmatpush1.msra.mxu0 0.0
      %1020 = vmatprep.subr.mxu0 0.0
      %1021 = vmatpush1.msra.mxu0 0.0
      %1022 = vmatprep.subr.mxu0 0.0
      %1023 = vmatpush1.msra.mxu0 0.0
      %1024 = vmatprep.subr.mxu0 0.0
      %1025 = vmatpush1.msra.mxu0 0.0
      %1026 = vmatprep.subr.mxu0 0.0
      %1027 = vmatpush1.msra.mxu0 0.0
      %1028 = vmatprep.subr.mxu0 0.0
      %1029 = vmatpush1.msra.mxu0 0.0
      %1030 = vmatprep.subr.mxu0 0.0
      %1031 = vmatpush1.msra.mxu0 0.0
      %1032 = vmatprep.subr.mxu0 0.0
      %1033 = vmatpush1.msra.mxu0 0.0
      %1034 = vmatprep.subr.mxu0 0.0
      %1035 = vmatpush1.msra.mxu0 0.0
      %1036 = vmatprep.mubr.f32.mxu0 0.0
      %1037 = vmatmul.mubr.f32.gmra.mrb[0].mxu0 %v967
      %v1038 = vpop.f32.mrb[0].mxu0
      %v1039 = vadd.f32 %v959, %v1038
      %v1040 = vpop.f32.mrb[0].mxu0
      %1041 = vmatprep.mubr.f32.mxu0 0.0
      %1042 = vmatmul.mubr.f32.gmra.mrb[0].mxu0 %v970
      %v1043 = vpop.f32.mrb[0].mxu0
      %v1044 = vadd.f32 %v964, %v1043
      %v1045 = vpop.f32.mrb[0].mxu0
      %1046 = vdwg.mxu0
      %v1047 = vmax.f32 %v1039, 0.0
      %v1048 = vmax.f32 %v1044, 0.0
      %v1049 = vld [vmem:[%s13] sm:$0xff]
      %v1050 = vld [vmem:[%s13 + $0x8] sm:$0xf]
      %1052 = vset.pattern.permute.xlu0 0
      %1053 = vperm.xlu0 %1052, %v1049
      %v1054 = vpop.permute.xlu0 %1053
      %1057 = vset.pattern.permute.xlu0 0
      %1058 = vperm.xlu0 %1057, %v1050
      %v1059 = vpop.permute.xlu0 %1058
      %v1061 = vmul.f32 %v1054, %v1047
      %v1062 = vmul.f32 %v1059, %v1048
      %v1063 = vsel %vm622, %v1062, 0.0
      %v1064 = vadd.f32 %v1061, %v1063
      %v1065 = vrot.slane %v1064, 4
      %v1066 = vadd.f32 %v1064, %v1065
      %v1067 = vrot.slane %v1066, 2
      %v1068 = vadd.f32 %v1066, %v1067
      %v1069 = vrot.slane %v1068, 1
      %v1070 = vadd.f32 %v1068, %v1069
      %v1071 = vld [vmem:[#allocation2] sm:$0x1]
      %1073 = vset.pattern.permute.xlu0 0
      %1074 = vperm.xlu0 %1073, %v1071
      %v1075 = vpop.permute.xlu0 %1074
      %v1077 = vlaneseq
      %v1078 = vshrl.u32 %v1077, 7
      %v1079 = vsub.s32 0, %v1078
      %v1080 = vrot.slane %v1075, %v1079
      %v1081 = vadd.f32 %v1070, %v1080
      %v1082 = vmax.f32 %v1081, 0.0
      %1083 = vst [vmem:[%s604] sm:$0x1] %v1082
      %p1084 = scmp.lt.s32.totalorder %s35, 1
      %s1085 = scalar_select %p1084, %s35, 1
      %p1086 = scmp.lt.s32.totalorder %s36, 1
      %s1087 = scalar_select %p1086, %s36, 1
      %s1088 = smul.addr %s1085, 2
      %s1089 = sadd.s32 %s1087, %s1088
      %s1090 = scalar_lea.vmem %s15, %s1089
      %p1091 = scmp.lt.s32.totalorder %s35, 1
      %s1092 = scalar_select %p1091, %s35, 1
      %p1093 = scmp.lt.s32.totalorder %s36, 1
      %s1094 = scalar_select %p1093, %s36, 1
      %s1095 = smul.addr %s1092, 2
      %s1096 = sadd.s32 %s1094, %s1095
      %s1097 = smul.addr %s1096, 4
      %s1098 = scalar_lea.vmem %s16, %s1097
      %p1099 = scmp.lt.s32.totalorder %s35, 1
      %s1100 = scalar_select %p1099, %s35, 1
      %p1101 = scmp.lt.s32.totalorder %s36, 1
      %s1102 = scalar_select %p1101, %s36, 1
      %s1103 = smul.addr %s1100, 2
      %s1104 = sadd.s32 %s1102, %s1103
      %s1105 = smul.addr %s1104, 4
      %s1106 = scalar_lea.vmem %s17, %s1105
      // Predicated region
      $region81: #{_ham_part_forward_impl.1} parent=79 // pred_check
        %p1107 = pneg %p385
      $region82: #{_ham_part_forward_impl.1} parent=79 // pred_check_branch
        %1109 = sbr.rel (%p1107) target = $region84
      $region83: #{_ham_part_forward_impl.1} parent=79 // pred_region
        _
      $region84: #{_ham_part_forward_impl.1} parent=79 // pred_fallthru
        _
      // Predicated region
      $region85: #{_ham_part_forward_impl.1} parent=79 // pred_check
        %p1110 = pneg %p413
      $region86: #{_ham_part_forward_impl.1} parent=79 // pred_check_branch
        %1112 = sbr.rel (%p1110) target = $region88
      $region87: #{_ham_part_forward_impl.1} parent=79 // pred_region
        _
      $region88: #{_ham_part_forward_impl.1} parent=79 // pred_fallthru
        _
      // Predicated region
      $region89: #{_ham_part_forward_impl.1} parent=79 // pred_check
        %p1113 = pneg %p441
      $region90: #{_ham_part_forward_impl.1} parent=79 // pred_check_branch
        %1115 = sbr.rel (%p1113) target = $region92
      $region91: #{_ham_part_forward_impl.1} parent=79 // pred_region
        _
      $region92: #{_ham_part_forward_impl.1} parent=79 // pred_fallthru
        _
    $region80: #{_ham_part_forward_impl.1} parent=5 // pred_fallthru
      _
    %p1116 = scmp.le.s32.totalorder 2, %s26
    // Predicated region
    $region93: #{_ham_part_forward_impl.1} parent=5 // pred_check
      %p1117 = pneg %p1116
    $region94: #{_ham_part_forward_impl.1} parent=5 // pred_check_branch
      %1119 = sbr.rel (%p1117) target = $region96
    $region95: #{_ham_part_forward_impl.1} parent=5 // pred_region
      %s1120 = ssub.s32 %s26, 2
      // Predicated region
      $region97: #{_ham_part_forward_impl.1} parent=95 // pred_check
        %p1121 = pneg %p391
      $region98: #{_ham_part_forward_impl.1} parent=95 // pred_check_branch
        %1123 = sbr.rel (%p1121) target = $region100
      $region99: #{_ham_part_forward_impl.1} parent=95 // pred_region
        %p1124 = scmp.lt.s32.totalorder %s37, 1
        %s1125 = scalar_select %p1124, %s37, 1
        %p1126 = scmp.lt.s32.totalorder %s38, 1
        %s1127 = scalar_select %p1126, %s38, 1
        %s1128 = smul.addr %s1125, 2
        %s1129 = sadd.s32 %s1127, %s1128
        %s1130 = scalar_lea.vmem %s15, %s1129
      $region100: #{_ham_part_forward_impl.1} parent=95 // pred_fallthru
        _
      // Predicated region
      $region101: #{_ham_part_forward_impl.1} parent=95 // pred_check
        %p1131 = pneg %p419
      $region102: #{_ham_part_forward_impl.1} parent=95 // pred_check_branch
        %1133 = sbr.rel (%p1131) target = $region104
      $region103: #{_ham_part_forward_impl.1} parent=95 // pred_region
        %p1134 = scmp.lt.s32.totalorder %s37, 1
        %s1135 = scalar_select %p1134, %s37, 1
        %p1136 = scmp.lt.s32.totalorder %s38, 1
        %s1137 = scalar_select %p1136, %s38, 1
        %s1138 = smul.addr %s1135, 2
        %s1139 = sadd.s32 %s1137, %s1138
        %s1140 = smul.addr %s1139, 4
        %s1141 = scalar_lea.vmem %s16, %s1140
      $region104: #{_ham_part_forward_impl.1} parent=95 // pred_fallthru
        _
      // Predicated region
      $region105: #{_ham_part_forward_impl.1} parent=95 // pred_check
        %p1142 = pneg %p447
      $region106: #{_ham_part_forward_impl.1} parent=95 // pred_check_branch
        %1144 = sbr.rel (%p1142) target = $region108
      $region107: #{_ham_part_forward_impl.1} parent=95 // pred_region
        %p1145 = scmp.lt.s32.totalorder %s37, 1
        %s1146 = scalar_select %p1145, %s37, 1
        %p1147 = scmp.lt.s32.totalorder %s38, 1
        %s1148 = scalar_select %p1147, %s38, 1
        %s1149 = smul.addr %s1146, 2
        %s1150 = sadd.s32 %s1148, %s1149
        %s1151 = smul.addr %s1150, 4
        %s1152 = scalar_lea.vmem %s17, %s1151
      $region108: #{_ham_part_forward_impl.1} parent=95 // pred_fallthru
        _
    $region96: #{_ham_part_forward_impl.1} parent=5 // pred_fallthru
      _
  $region6: #{_ham_part_forward_impl.1} parent=0 // loop_footer
    %s30 = sadd.s32 1, %s26
  $region7: #{_ham_part_forward_impl.1} parent=0 // loop_footer_branch
    %25 = sbr.rel target = $region3
  $region8: #{_ham_part_forward_impl.1} parent=0 // loop_exit
    _

</llo_original>
